<compile_context>
chip_gen: v6e
topology: v6e:2x2x1
jax: 0.10.0
libtpu: 0.0.40
codegen_flags: <defaults>
</compile_context>

<pallas_src>
import functools

import jax
import jax.numpy as jnp
from jax.experimental import pallas as pl
from jax.experimental.pallas import tpu as pltpu

LANES = 128                 # TPU lane width
HIDDEN = 128                # layer1 output width from the PyTorch module
MAX_TILE_R = 2048           # max slab rows per grid step (VMEM budget, see header)
VMEM_LIMIT_BYTES = 40 * 1024 * 1024   # < v7x's 64MiB physical, ample headroom here


def _round_up(x, m):
    return (x + m - 1) // m * m


# ---------------------------------------------------------------------------
# Kernel: one batch tile in slab layout.
# ---------------------------------------------------------------------------
def dqn_forward_kernel(x_ref, w1_ref, b1_ref, wout_ref, bout_ref, o_ref):
    # x_ref    : (tile_r, 128) f32   -- g = 128//D state rows packed per slab row
    # w1_ref   : (128, g*128) bf16   -- block-diag kron(I_g, W1^T), VMEM-resident
    # b1_ref   : (1, g*128)   f32
    # wout_ref : (g*128, 128) bf16   -- block-diag kron(I_g, Wout^T), VMEM-resident
    # bout_ref : (1, 128)     f32
    # o_ref    : (tile_r, 128) f32
    # MXU matmuls in bf16 (f32 accumulation); bias/ReLU/mul stay f32 on the VPU path.
    h = jnp.dot(x_ref[...].astype(jnp.bfloat16), w1_ref[...],
                preferred_element_type=jnp.float32)          # (tile_r, g*128)
    h = jnp.maximum(h + b1_ref[...], 0.0)                    # layer1: Linear + ReLU
    q = jnp.dot(h.astype(jnp.bfloat16), wout_ref[...],
                preferred_element_type=jnp.float32)          # (tile_r, 128)
    q = q + bout_ref[...]                                    # layerOut
    # Re-read x from VMEM here (instead of capturing it before the matmuls) so the f32
    # state is not live in vregs across the (tile_r, g*128) h intermediate.
    o_ref[...] = q * x_ref[...]                              # torch.mul(qvalues, state_t)


# ---------------------------------------------------------------------------
# Hoisted parameter prep (once per model, NOT per forward call).
# ---------------------------------------------------------------------------
def prepare_params(w1, b1, wout, bout):
    """Build lane-dense block-diagonal bf16 weights for the slab layout."""
    w1 = jnp.asarray(w1, jnp.float32)        # (H, D)  PyTorch (out, in) layout
    b1 = jnp.asarray(b1, jnp.float32)        # (H,)
    wout = jnp.asarray(wout, jnp.float32)    # (A, H)
    bout = jnp.asarray(bout, jnp.float32)    # (A,)
    H, D = w1.shape
    A = wout.shape[0]
    assert A == D, "torch.mul(qvalues, state_t) requires n_actions == state_dim"
    assert H == HIDDEN
    assert LANES % D == 0, "lane-dense slab layout needs state_dim to divide 128"
    g = LANES // D                           # state rows packed per 128-lane slab row
    eye = jnp.eye(g, dtype=jnp.float32)
    w1_big = jnp.kron(eye, w1.T)             # (g*D, g*H) = (128, g*128)
    wout_big = jnp.kron(eye, wout.T)         # (g*H, g*A) = (g*128, 128)
    return {
        "w1": w1_big.astype(jnp.bfloat16),
        "b1": jnp.tile(b1, g)[None, :],                  # (1, g*H) f32
        "wout": wout_big.astype(jnp.bfloat16),
        "bout": jnp.tile(bout, g)[None, :],              # (1, g*A) = (1, 128) f32
    }


# ---------------------------------------------------------------------------
# Forward wrapper.
# ---------------------------------------------------------------------------
@functools.partial(jax.jit, static_argnames=("max_tile_r",))
def dqn_forward(state, params, *, max_tile_r=MAX_TILE_R):
    """state: (B, D) f32; params: from prepare_params(). Returns (B, D) f32."""
    state = jnp.asarray(state, jnp.float32)
    B, D = state.shape
    g = LANES // D
    w1_big = params["w1"]
    gH = w1_big.shape[1]                      # g * HIDDEN
    assert w1_big.shape[0] == g * D == LANES

    # ---- grid sizing (review items 1/2/3/6) ---------------------------------
    R = pl.cdiv(B, g)                         # slab rows needed for B state rows
    if R < 16:
        n_steps = 1                           # tiny batch: single step (overhead rules)
    else:
        n_steps = max(2, pl.cdiv(_round_up(R, 8), max_tile_r))
        n_steps += n_steps % 2                # even grid so both v7x TCs get work
    tile_r = _round_up(pl.cdiv(R, n_steps), 8)   # slab rows / step, 8-sublane aligned
    Rp = n_steps * tile_r
    Bp = Rp * g
    if Bp != B:
        # Minimal pad (< n_steps*8*g rows) so tile_r divides the slab exactly; NOT a
        # round-up to a large tile multiple.  Padded rows are sliced off at the end.
        state = jnp.pad(state, ((0, Bp - B), (0, 0)))

    x_slab = state.reshape(Rp, LANES)         # free row-major reshape -> lane-dense slab

    weight_bytes = 2 * (params["w1"].size + params["wout"].size) \
                 + 4 * (params["b1"].size + params["bout"].size)
    cost = pl.CostEstimate(
        flops=4 * Bp * D * HIDDEN,            # two (D<->HIDDEN) matmuls per state row
        transcendentals=0,
        bytes_accessed=8 * Bp * D + weight_bytes,
    )

    resident = dict(pipeline_mode=pl.Buffered(1))   # fetched once & revisited: no 2x buffer
    out_slab = pl.pallas_call(
        dqn_forward_kernel,
        out_shape=jax.ShapeDtypeStruct((Rp, LANES), jnp.float32),
        grid_spec=pltpu.PrefetchScalarGridSpec(
            num_scalar_prefetch=0,
            grid=(n_steps,),
            in_specs=[
                pl.BlockSpec((tile_r, LANES), lambda i: (i, 0)),           # state (pipelined)
                pl.BlockSpec((LANES, gH), lambda i: (0, 0), **resident),   # W1 block-diag
                pl.BlockSpec((1, gH), lambda i: (0, 0), **resident),       # b1
                pl.BlockSpec((gH, LANES), lambda i: (0, 0), **resident),   # Wout block-diag
                pl.BlockSpec((1, LANES), lambda i: (0, 0), **resident),    # bout
            ],
            out_specs=pl.BlockSpec((tile_r, LANES), lambda i: (i, 0)),
        ),
        compiler_params=pltpu.CompilerParams(
            dimension_semantics=("parallel",),   # batch tiles shard across v7x's 2 TCs
            vmem_limit_bytes=VMEM_LIMIT_BYTES,
        ),
        cost_estimate=cost,
    )(x_slab, w1_big, params["b1"], params["wout"], params["bout"])

    out = out_slab.reshape(Bp, D)             # free reshape back to (B, D)
    return out[:B] if Bp != B else out


# ---------------------------------------------------------------------------
# Pure-JAX reference (PyTorch forward semantics).
# ---------------------------------------------------------------------------
def dqn_forward_ref(state, w1, b1, wout, bout, *, bf16_matmul=False):
    state = jnp.asarray(state, jnp.float32)
    w1 = jnp.asarray(w1, jnp.float32)
    wout = jnp.asarray(wout, jnp.float32)
    if bf16_matmul:   # mirrors the kernel's bf16 MXU inputs / f32 elementwise path
        x_mm = state.astype(jnp.bfloat16).astype(jnp.float32)
        w1 = w1.astype(jnp.bfloat16).astype(jnp.float32)
        wout = wout.astype(jnp.bfloat16).astype(jnp.float32)
    else:
        x_mm = state
    h = jnp.maximum(x_mm @ w1.T + b1, 0.0)
    if bf16_matmul:
        h = h.astype(jnp.bfloat16).astype(jnp.float32)
    q = h @ wout.T + bout
    return q * state


if __name__ == "__main__":
    # NOTE: for tiny per-step batches (B ~ 8) this op is pure launch overhead and plain
    # XLA fusion is the right tool; the Pallas kernel pays off once many environments /
    # agent steps are stacked into one large batch, as exercised below.
    STATE_DIM = 16           # n_actions == state_dim (required by torch.mul(q, state_t))
    N_ACTIONS = STATE_DIM

    key = jax.random.PRNGKey(0)
    k_x, k_w1, k_b1, k_wo, k_bo, k_x2 = jax.random.split(key, 6)

    lim1 = 1.0 / jnp.sqrt(STATE_DIM)
    w1 = jax.random.uniform(k_w1, (HIDDEN, STATE_DIM), jnp.float32, -lim1, lim1)
    b1 = jax.random.uniform(k_b1, (HIDDEN,), jnp.float32, -lim1, lim1)
    lim2 = 1.0 / jnp.sqrt(HIDDEN)
    wout = jax.random.uniform(k_wo, (N_ACTIONS, HIDDEN), jnp.float32, -lim2, lim2)
    bout = jax.random.uniform(k_bo, (N_ACTIONS,), jnp.float32, -lim2, lim2)

    # TODO(synk): layer2 (Linear 128->100) and layerRNN (5-layer LSTM) are declared in
    # __init__ but never used in forward(); intentionally not implemented.  The numpy
    # epsilon-greedy sample_actions() is host-side logic, also out of kernel scope.

    params = prepare_params(w1, b1, wout, bout)   # hoisted: once per model, not per call

    # Large stacked batch: 2 grid steps x 1024 rows (even grid -> both v7x TCs busy).
    B = 2048
    state = jax.random.normal(k_x, (B, STATE_DIM), jnp.float32)
    out = jax.block_until_ready(dqn_forward(state, params))
    assert out.shape == (B, N_ACTIONS)
    ref_bf16 = dqn_forward_ref(state, w1, b1, wout, bout, bf16_matmul=True)
    assert jnp.allclose(out, ref_bf16, atol=2e-3, rtol=2e-3), "mismatch vs bf16-input reference"
    ref_f32 = dqn_forward_ref(state, w1, b1, wout, bout, bf16_matmul=False)
    assert jnp.allclose(out, ref_f32, atol=1e-1, rtol=1e-1), "mismatch vs f32 reference"

    # Small ragged batch: exercises the minimal-pad, single-step path.
    Bs = 10
    state_s = jax.random.normal(k_x2, (Bs, STATE_DIM), jnp.float32)
    out_s = jax.block_until_ready(dqn_forward(state_s, params))
    assert out_s.shape == (Bs, N_ACTIONS)
    ref_s = dqn_forward_ref(state_s, w1, b1, wout, bout, bf16_matmul=True)
    assert jnp.allclose(out_s, ref_s, atol=2e-3, rtol=2e-3), "mismatch on ragged batch"

    print("KERNEL_OK")
</pallas_src>

<mosaic_0001>
module attributes {stable_mosaic.version = 11 : i64} {
  func.func @dqn_forward_kernel(%arg0: i32, %arg1: memref<128x128xf32, #tpu.memory_space<vmem>>, %arg2: memref<128x1024xbf16, #tpu.memory_space<vmem>>, %arg3: memref<1x1024xf32, #tpu.memory_space<vmem>>, %arg4: memref<1024x128xbf16, #tpu.memory_space<vmem>>, %arg5: memref<1x128xf32, #tpu.memory_space<vmem>>, %arg6: memref<128x128xf32, #tpu.memory_space<vmem>>) attributes {dimension_semantics = [#tpu.dimension_semantics<parallel>], iteration_bounds = array<i64: 2>, scalar_prefetch = 0 : i64, scratch_operands = 0 : i64, tpu.core_type = #tpu.core_type<tc>, window_params = [{transform_indices = @transform_0, window_bounds = array<i64: 128, 128>}, {pipeline_mode = #tpu.pipeline_mode<synchronous>, transform_indices = @transform_1, window_bounds = array<i64: 128, 1024>}, {pipeline_mode = #tpu.pipeline_mode<synchronous>, transform_indices = @transform_2, window_bounds = array<i64: 1, 1024>}, {pipeline_mode = #tpu.pipeline_mode<synchronous>, transform_indices = @transform_3, window_bounds = array<i64: 1024, 128>}, {pipeline_mode = #tpu.pipeline_mode<synchronous>, transform_indices = @transform_4, window_bounds = array<i64: 1, 128>}, {transform_indices = @transform_5, window_bounds = array<i64: 128, 128>}]} {
    %c0 = arith.constant 0 : index
    %c0_0 = arith.constant 0 : index
    %0 = vector.load %arg1[%c0, %c0_0] : memref<128x128xf32, #tpu.memory_space<vmem>>, vector<128x128xf32>
    %1 = arith.truncf %0 : vector<128x128xf32> to vector<128x128xbf16>
    %c0_1 = arith.constant 0 : index
    %c0_2 = arith.constant 0 : index
    %2 = vector.load %arg2[%c0_1, %c0_2] : memref<128x1024xbf16, #tpu.memory_space<vmem>>, vector<128x1024xbf16>
    %cst = arith.constant dense<0.000000e+00> : vector<128x1024xf32>
    %3 = tpu.matmul %1, %2, %cst {dimension_numbers = #tpu.dot_dimension_numbers<[1], [0], [0], [1], [0, 0, 1, 1], [], []>} : vector<128x128xbf16>, vector<128x1024xbf16>, vector<128x1024xf32> -> vector<128x1024xf32>
    %c0_3 = arith.constant 0 : index
    %c0_4 = arith.constant 0 : index
    %4 = vector.load %arg3[%c0_3, %c0_4] : memref<1x1024xf32, #tpu.memory_space<vmem>>, vector<1x1024xf32>
    %5 = vector.broadcast %4 : vector<1x1024xf32> to vector<128x1024xf32>
    %6 = arith.addf %3, %5 : vector<128x1024xf32>
    %cst_5 = arith.constant 0.000000e+00 : f32
    %7 = vector.broadcast %cst_5 : f32 to vector<128x1024xf32>
    %8 = arith.maximumf %6, %7 : vector<128x1024xf32>
    %9 = arith.truncf %8 : vector<128x1024xf32> to vector<128x1024xbf16>
    %c0_6 = arith.constant 0 : index
    %c0_7 = arith.constant 0 : index
    %10 = vector.load %arg4[%c0_6, %c0_7] : memref<1024x128xbf16, #tpu.memory_space<vmem>>, vector<1024x128xbf16>
    %cst_8 = arith.constant dense<0.000000e+00> : vector<128x128xf32>
    %11 = tpu.matmul %9, %10, %cst_8 {dimension_numbers = #tpu.dot_dimension_numbers<[1], [0], [0], [1], [0, 0, 1, 1], [], []>} : vector<128x1024xbf16>, vector<1024x128xbf16>, vector<128x128xf32> -> vector<128x128xf32>
    %c0_9 = arith.constant 0 : index
    %c0_10 = arith.constant 0 : index
    %12 = vector.load %arg5[%c0_9, %c0_10] : memref<1x128xf32, #tpu.memory_space<vmem>>, vector<1x128xf32>
    %13 = vector.broadcast %12 : vector<1x128xf32> to vector<128x128xf32>
    %14 = arith.addf %11, %13 : vector<128x128xf32>
    %c0_11 = arith.constant 0 : index
    %c0_12 = arith.constant 0 : index
    %15 = vector.load %arg1[%c0_11, %c0_12] : memref<128x128xf32, #tpu.memory_space<vmem>>, vector<128x128xf32>
    %16 = arith.mulf %14, %15 : vector<128x128xf32>
    %c0_13 = arith.constant 0 : index
    %c0_14 = arith.constant 0 : index
    %17 = vector.load %arg6[%c0_13, %c0_14] : memref<128x128xf32, #tpu.memory_space<vmem>>, vector<128x128xf32>
    tpu.vector_store %arg6[%c0_13, %c0_14], %16 {strides = array<i32>} : memref<128x128xf32, #tpu.memory_space<vmem>>, vector<128x128xf32>,
    return
  }
  func.func @transform_0(%arg0: i32) -> (i32, i32) {
    %c0_i32 = arith.constant 0 : i32
    %c0_i32_0 = arith.constant 0 : i32
    return %arg0, %c0_i32 : i32, i32
  }
  func.func @transform_1(%arg0: i32) -> (i32, i32) {
    %c0_i32 = arith.constant 0 : i32
    %c0_i32_0 = arith.constant 0 : i32
    %c0_i32_1 = arith.constant 0 : i32
    return %c0_i32, %c0_i32_0 : i32, i32
  }
  func.func @transform_2(%arg0: i32) -> (i32, i32) {
    %c0_i32 = arith.constant 0 : i32
    %c0_i32_0 = arith.constant 0 : i32
    %c0_i32_1 = arith.constant 0 : i32
    return %c0_i32, %c0_i32_0 : i32, i32
  }
  func.func @transform_3(%arg0: i32) -> (i32, i32) {
    %c0_i32 = arith.constant 0 : i32
    %c0_i32_0 = arith.constant 0 : i32
    %c0_i32_1 = arith.constant 0 : i32
    return %c0_i32, %c0_i32_0 : i32, i32
  }
  func.func @transform_4(%arg0: i32) -> (i32, i32) {
    %c0_i32 = arith.constant 0 : i32
    %c0_i32_0 = arith.constant 0 : i32
    %c0_i32_1 = arith.constant 0 : i32
    return %c0_i32, %c0_i32_0 : i32, i32
  }
  func.func @transform_5(%arg0: i32) -> (i32, i32) {
    %c0_i32 = arith.constant 0 : i32
    %c0_i32_0 = arith.constant 0 : i32
    return %arg0, %c0_i32 : i32, i32
  }
}

</mosaic_0001>

<llo_original>
// kernel: dqn_forward.1
$region0: #{dqn_forward.1}
  #allocation0 [shape = 'u32[]', space=smem, size = 0x4, offset = 0x4, fixed_abs, tag = 'smem constant byte address 0x4 - core index']
  #allocation1 [shape = 'u32[144,128]{1,0:T(1,128)}', space=vmem, size = 0x12000, scoped, tag = 'internal scratch']
  %s0 = inlined_call_operand.vmem [shape: f32[256,128], index: 0, kind: input, shape index: {}]
  %s1 = inlined_call_operand.vmem [shape: bf16[128,1024], index: 1, kind: input, shape index: {}]
  %s2 = inlined_call_operand.vmem [shape: f32[1,1024], index: 2, kind: input, shape index: {}]
  %s3 = inlined_call_operand.vmem [shape: bf16[1024,128], index: 3, kind: input, shape index: {}]
  %s4 = inlined_call_operand.vmem [shape: f32[1,128], index: 4, kind: input, shape index: {}]
  %s5 = inlined_call_operand.vmem [shape: f32[256,128], index: 5, kind: output, shape index: {}]
  %s6 = sld [smem:[#allocation0]]
  $region53: #{dqn_forward.1} parent=0
    _
  %s8 = ssub.s32 1, %s6
  %s9 = scalar_select 0, %s8, %s6
  loop: start=0, step=1, limit=4
  $region2: #{dqn_forward.1} parent=0 // loop_pre_header
    _
  $region3: #{dqn_forward.1} parent=0 // loop_header
    %s11 = sphi 0, %s15
    %p12 = scmp.ge.s32.totalorder %s11, 4
    %s21 = sphi 0, %s23
    %s24 = sphi 0, %s21
    %s25 = sphi 0, %s24
    %s41 = sphi 0, %s25
    %s45 = sphi 0, %s45
    %s47 = sphi 0, %s45
    %s48 = sphi 0, %s47
    %s62 = sphi 0, %s48
    %s66 = sphi 0, %s66
    %s68 = sphi 0, %s66
    %s69 = sphi 0, %s68
    %s83 = sphi 0, %s69
    %s87 = sphi 0, %s87
    %s89 = sphi 0, %s87
    %s90 = sphi 0, %s89
    %s104 = sphi 0, %s90
    %s108 = sphi 0, %s108
    %s110 = sphi 0, %s108
    %s111 = sphi 0, %s110
    %s125 = sphi 0, %s111
    %s131 = sphi 0, %s133
    %s134 = sphi 0, %s131
    %s135 = sphi 0, %s134
    %s151 = sphi 0, %s135
  $region4: #{dqn_forward.1} parent=0 // loop_header_branch
    %14 = sbr.rel (%p12) target = $region8
  $region5: #{dqn_forward.1} parent=0 // loop_body
    %s16 = ssub.s32 %s11, 1
    %s17 = ssub.s32 %s11, 2
    %s18 = sadd.s32 %s11, 1
    %s19 = ssub.s32 %s11, %s18
    %p20 = scmp.eq.s32.totalorder %s19, 0
    %s22 = sadd.s32 %s21, 1
    %s23 = scalar_select %p20, %s21, %s22
    %p26 = pneg %p20
    %p27 = scmp.eq.s32.totalorder %s11, 1
    %p28 = por %p26, %p27
    %p29 = scmp.ne.s32.totalorder %s21, %s24
    %p30 = scmp.eq.s32.totalorder %s11, 0
    %p31 = por %p29, %p30
    %p32 = scmp.ne.s32.totalorder %s21, %s24
    %p33 = scmp.eq.s32.totalorder %s16, 1
    %p34 = por %p32, %p33
    %p35 = scmp.ne.s32.totalorder %s24, %s25
    %p36 = scmp.eq.s32.totalorder %s16, 0
    %p37 = por %p35, %p36
    %p38 = scmp.ne.s32.totalorder %s24, %s25
    %p39 = scmp.eq.s32.totalorder %s17, 1
    %p40 = por %p38, %p39
    %p42 = scmp.ne.s32.totalorder %s25, %s41
    %p43 = scmp.eq.s32.totalorder %s17, 0
    %p44 = por %p42, %p43
    %s46 = sadd.s32 %s45, 1
    %p49 = scmp.eq.s32.totalorder %s11, 1
    %p50 = scmp.ne.s32.totalorder %s45, %s47
    %p51 = scmp.eq.s32.totalorder %s11, 0
    %p52 = por %p50, %p51
    %p53 = scmp.ne.s32.totalorder %s45, %s47
    %p54 = scmp.eq.s32.totalorder %s16, 1
    %p55 = por %p53, %p54
    %p56 = scmp.ne.s32.totalorder %s47, %s48
    %p57 = scmp.eq.s32.totalorder %s16, 0
    %p58 = por %p56, %p57
    %p59 = scmp.ne.s32.totalorder %s47, %s48
    %p60 = scmp.eq.s32.totalorder %s17, 1
    %p61 = por %p59, %p60
    %p63 = scmp.ne.s32.totalorder %s48, %s62
    %p64 = scmp.eq.s32.totalorder %s17, 0
    %p65 = por %p63, %p64
    %s67 = sadd.s32 %s66, 1
    %p70 = scmp.eq.s32.totalorder %s11, 1
    %p71 = scmp.ne.s32.totalorder %s66, %s68
    %p72 = scmp.eq.s32.totalorder %s11, 0
    %p73 = por %p71, %p72
    %p74 = scmp.ne.s32.totalorder %s66, %s68
    %p75 = scmp.eq.s32.totalorder %s16, 1
    %p76 = por %p74, %p75
    %p77 = scmp.ne.s32.totalorder %s68, %s69
    %p78 = scmp.eq.s32.totalorder %s16, 0
    %p79 = por %p77, %p78
    %p80 = scmp.ne.s32.totalorder %s68, %s69
    %p81 = scmp.eq.s32.totalorder %s17, 1
    %p82 = por %p80, %p81
    %p84 = scmp.ne.s32.totalorder %s69, %s83
    %p85 = scmp.eq.s32.totalorder %s17, 0
    %p86 = por %p84, %p85
    %s88 = sadd.s32 %s87, 1
    %p91 = scmp.eq.s32.totalorder %s11, 1
    %p92 = scmp.ne.s32.totalorder %s87, %s89
    %p93 = scmp.eq.s32.totalorder %s11, 0
    %p94 = por %p92, %p93
    %p95 = scmp.ne.s32.totalorder %s87, %s89
    %p96 = scmp.eq.s32.totalorder %s16, 1
    %p97 = por %p95, %p96
    %p98 = scmp.ne.s32.totalorder %s89, %s90
    %p99 = scmp.eq.s32.totalorder %s16, 0
    %p100 = por %p98, %p99
    %p101 = scmp.ne.s32.totalorder %s89, %s90
    %p102 = scmp.eq.s32.totalorder %s17, 1
    %p103 = por %p101, %p102
    %p105 = scmp.ne.s32.totalorder %s90, %s104
    %p106 = scmp.eq.s32.totalorder %s17, 0
    %p107 = por %p105, %p106
    %s109 = sadd.s32 %s108, 1
    %p112 = scmp.eq.s32.totalorder %s11, 1
    %p113 = scmp.ne.s32.totalorder %s108, %s110
    %p114 = scmp.eq.s32.totalorder %s11, 0
    %p115 = por %p113, %p114
    %p116 = scmp.ne.s32.totalorder %s108, %s110
    %p117 = scmp.eq.s32.totalorder %s16, 1
    %p118 = por %p116, %p117
    %p119 = scmp.ne.s32.totalorder %s110, %s111
    %p120 = scmp.eq.s32.totalorder %s16, 0
    %p121 = por %p119, %p120
    %p122 = scmp.ne.s32.totalorder %s110, %s111
    %p123 = scmp.eq.s32.totalorder %s17, 1
    %p124 = por %p122, %p123
    %p126 = scmp.ne.s32.totalorder %s111, %s125
    %p127 = scmp.eq.s32.totalorder %s17, 0
    %p128 = por %p126, %p127
    %s129 = ssub.s32 %s11, %s18
    %p130 = scmp.eq.s32.totalorder %s129, 0
    %s132 = sadd.s32 %s131, 1
    %s133 = scalar_select %p130, %s131, %s132
    %p136 = pneg %p130
    %p137 = scmp.eq.s32.totalorder %s11, 1
    %p138 = por %p136, %p137
    %p139 = scmp.ne.s32.totalorder %s131, %s134
    %p140 = scmp.eq.s32.totalorder %s11, 0
    %p141 = por %p139, %p140
    %p142 = scmp.ne.s32.totalorder %s131, %s134
    %p143 = scmp.eq.s32.totalorder %s16, 1
    %p144 = por %p142, %p143
    %p145 = scmp.ne.s32.totalorder %s134, %s135
    %p146 = scmp.eq.s32.totalorder %s16, 0
    %p147 = por %p145, %p146
    %p148 = scmp.ne.s32.totalorder %s134, %s135
    %p149 = scmp.eq.s32.totalorder %s17, 1
    %p150 = por %p148, %p149
    %p152 = scmp.ne.s32.totalorder %s135, %s151
    %p153 = scmp.eq.s32.totalorder %s17, 0
    %p154 = por %p152, %p153
    %p155 = scmp.le.s32.totalorder 1, %s11
    %p156 = scmp.lt.s32.totalorder %s11, 3
    %p157 = pnand %p155, %p156
    %p158 = pneg %p157
    // Predicated region
    $region9: #{dqn_forward.1} parent=5 // pred_check
      _
    $region10: #{dqn_forward.1} parent=5 // pred_check_branch
      %160 = sbr.rel (%p157) target = $region12
    $region11: #{dqn_forward.1} parent=5 // pred_region
      %s161 = ssub.s32 %s11, 1
      // Predicated region
      $region13: #{dqn_forward.1} parent=11 // pred_check
        %p162 = pneg %p58
      $region14: #{dqn_forward.1} parent=11 // pred_check_branch
        %164 = sbr.rel (%p162) target = $region16
      $region15: #{dqn_forward.1} parent=11 // pred_region
        _
      $region16: #{dqn_forward.1} parent=11 // pred_fallthru
        _
      // Predicated region
      $region17: #{dqn_forward.1} parent=11 // pred_check
        %p165 = pneg %p79
      $region18: #{dqn_forward.1} parent=11 // pred_check_branch
        %167 = sbr.rel (%p165) target = $region20
      $region19: #{dqn_forward.1} parent=11 // pred_region
        _
      $region20: #{dqn_forward.1} parent=11 // pred_fallthru
        _
      // Predicated region
      $region21: #{dqn_forward.1} parent=11 // pred_check
        %p168 = pneg %p100
      $region22: #{dqn_forward.1} parent=11 // pred_check_branch
        %170 = sbr.rel (%p168) target = $region24
      $region23: #{dqn_forward.1} parent=11 // pred_region
        _
      $region24: #{dqn_forward.1} parent=11 // pred_fallthru
        _
      // Predicated region
      $region25: #{dqn_forward.1} parent=11 // pred_check
        %p171 = pneg %p121
      $region26: #{dqn_forward.1} parent=11 // pred_check_branch
        %173 = sbr.rel (%p171) target = $region28
      $region27: #{dqn_forward.1} parent=11 // pred_region
        _
      $region28: #{dqn_forward.1} parent=11 // pred_fallthru
        _
    $region12: #{dqn_forward.1} parent=5 // pred_fallthru
      _
    %p174 = scmp.lt.s32.totalorder %s11, 2
    // Predicated region
    $region29: #{dqn_forward.1} parent=5 // pred_check
      %p175 = pneg %p174
    $region30: #{dqn_forward.1} parent=5 // pred_check_branch
      %177 = sbr.rel (%p175) target = $region32
    $region31: #{dqn_forward.1} parent=5 // pred_region
      // Predicated region
      $region33: #{dqn_forward.1} parent=31 // pred_check
        %p178 = pneg %p31
      $region34: #{dqn_forward.1} parent=31 // pred_check_branch
        %180 = sbr.rel (%p178) target = $region36
      $region35: #{dqn_forward.1} parent=31 // pred_region
        %s181 = smul.u32 16, %s11
        %p182 = scmp.lt.s32.totalorder %s181, 31
        %s183 = scalar_select %p182, %s181, 31
        %s184 = smul.addr %s183, 8
        %s185 = scalar_lea.vmem %s0, %s184
        %s186 = smul.u32 16, %s11
      $region36: #{dqn_forward.1} parent=31 // pred_fallthru
        _
    $region32: #{dqn_forward.1} parent=5 // pred_fallthru
      _
    %p187 = scmp.le.s32.totalorder 1, %s11
    %p188 = scmp.lt.s32.totalorder %s11, 3
    %p189 = pnand %p187, %p188
    %p190 = pneg %p189
    // Predicated region
    $region37: #{dqn_forward.1} parent=5 // pred_check
      _
    $region38: #{dqn_forward.1} parent=5 // pred_check_branch
      %192 = sbr.rel (%p189) target = $region40
    $region39: #{dqn_forward.1} parent=5 // pred_region
      %s193 = ssub.s32 %s11, 1
      %s194 = smul.u32 16, %s16
      %p195 = scmp.lt.s32.totalorder %s194, 31
      %s196 = scalar_select %p195, %s194, 31
      %s197 = smul.addr %s196, 8
      %s198 = scalar_lea.vmem %s0, %s197
      %p199 = pneg %p37
      %p200 = pneg %p34
      %p201 = pneg %p58
      %p202 = pneg %p55
      %p203 = pneg %p79
      %p204 = pneg %p76
      %p205 = pneg %p100
      %p206 = pneg %p97
      %p207 = pneg %p121
      %p208 = pneg %p118
      %p209 = pneg %p147
      %p210 = pneg %p144
      %s211 = smul.u32 16, %s16
      %p212 = scmp.lt.s32.totalorder %s211, 31
      %s213 = scalar_select %p212, %s211, 31
      %s214 = smul.addr %s213, 8
      %s215 = scalar_lea.vmem %s5, %s214
      %s216 = smul.u32 16, %s16
      %p217 = scmp.lt.s32.totalorder %s216, 31
      %s218 = scalar_select %p217, %s216, 31
      %s219 = smul.addr %s218, 8
      %s220 = scalar_lea.vmem %s0, %s219
      %s221 = smul.u32 16, %s16
      %s222 = smul.u32 16, %s16
      %p223 = scmp.lt.s32.totalorder %s222, 31
      %s224 = scalar_select %p223, %s222, 31
      %s225 = smul.addr %s224, 8
      %s226 = scalar_lea.vmem %s5, %s225
      %s227 = smul.u32 16, %s16
      %v229 = vld [vmem:[%s220] sm:$0xff]
      %v230 = vld [vmem:[%s220 + $0x8] sm:$0xff]
      %v231 = vld [vmem:[%s220 + $0x10] sm:$0xff]
      %v232 = vld [vmem:[%s220 + $0x18] sm:$0xff]
      %v233 = vld [vmem:[%s220 + $0x20] sm:$0xff]
      %v234 = vld [vmem:[%s220 + $0x28] sm:$0xff]
      %v235 = vld [vmem:[%s220 + $0x30] sm:$0xff]
      %v236 = vld [vmem:[%s220 + $0x38] sm:$0xff]
      %v237 = vld [vmem:[%s220 + $0x40] sm:$0xff]
      %v238 = vld [vmem:[%s220 + $0x48] sm:$0xff]
      %v239 = vld [vmem:[%s220 + $0x50] sm:$0xff]
      %v240 = vld [vmem:[%s220 + $0x58] sm:$0xff]
      %v241 = vld [vmem:[%s220 + $0x60] sm:$0xff]
      %v242 = vld [vmem:[%s220 + $0x68] sm:$0xff]
      %v243 = vld [vmem:[%s220 + $0x70] sm:$0xff]
      %v244 = vld [vmem:[%s220 + $0x78] sm:$0xff]
      %v245 = vpack.c.bf16 %v230, %v229
      %v246 = vpack.c.bf16 %v232, %v231
      %v247 = vpack.c.bf16 %v234, %v233
      %v248 = vpack.c.bf16 %v236, %v235
      %v249 = vpack.c.bf16 %v238, %v237
      %v250 = vpack.c.bf16 %v240, %v239
      %v251 = vpack.c.bf16 %v242, %v241
      %v252 = vpack.c.bf16 %v244, %v243
      %v253 = vld [vmem:[%s1] sm:$0xff]
      %v254 = vld [vmem:[%s1 + $0x8] sm:$0xff]
      %v255 = vld [vmem:[%s1 + $0x10] sm:$0xff]
      %v256 = vld [vmem:[%s1 + $0x18] sm:$0xff]
      %v257 = vld [vmem:[%s1 + $0x20] sm:$0xff]
      %v258 = vld [vmem:[%s1 + $0x28] sm:$0xff]
      %v259 = vld [vmem:[%s1 + $0x30] sm:$0xff]
      %v260 = vld [vmem:[%s1 + $0x38] sm:$0xff]
      %v261 = vld [vmem:[%s1 + $0x40] sm:$0xff]
      %v262 = vld [vmem:[%s1 + $0x48] sm:$0xff]
      %v263 = vld [vmem:[%s1 + $0x50] sm:$0xff]
      %v264 = vld [vmem:[%s1 + $0x58] sm:$0xff]
      %v265 = vld [vmem:[%s1 + $0x60] sm:$0xff]
      %v266 = vld [vmem:[%s1 + $0x68] sm:$0xff]
      %v267 = vld [vmem:[%s1 + $0x70] sm:$0xff]
      %v268 = vld [vmem:[%s1 + $0x78] sm:$0xff]
      %v269 = vld [vmem:[%s1 + $0x80] sm:$0xff]
      %v270 = vld [vmem:[%s1 + $0x88] sm:$0xff]
      %v271 = vld [vmem:[%s1 + $0x90] sm:$0xff]
      %v272 = vld [vmem:[%s1 + $0x98] sm:$0xff]
      %v273 = vld [vmem:[%s1 + $0xa0] sm:$0xff]
      %v274 = vld [vmem:[%s1 + $0xa8] sm:$0xff]
      %v275 = vld [vmem:[%s1 + $0xb0] sm:$0xff]
      %v276 = vld [vmem:[%s1 + $0xb8] sm:$0xff]
      %v277 = vld [vmem:[%s1 + $0xc0] sm:$0xff]
      %v278 = vld [vmem:[%s1 + $0xc8] sm:$0xff]
      %v279 = vld [vmem:[%s1 + $0xd0] sm:$0xff]
      %v280 = vld [vmem:[%s1 + $0xd8] sm:$0xff]
      %v281 = vld [vmem:[%s1 + $0xe0] sm:$0xff]
      %v282 = vld [vmem:[%s1 + $0xe8] sm:$0xff]
      %v283 = vld [vmem:[%s1 + $0xf0] sm:$0xff]
      %v284 = vld [vmem:[%s1 + $0xf8] sm:$0xff]
      %v285 = vld [vmem:[%s1 + $0x100] sm:$0xff]
      %v286 = vld [vmem:[%s1 + $0x108] sm:$0xff]
      %v287 = vld [vmem:[%s1 + $0x110] sm:$0xff]
      %v288 = vld [vmem:[%s1 + $0x118] sm:$0xff]
      %v289 = vld [vmem:[%s1 + $0x120] sm:$0xff]
      %v290 = vld [vmem:[%s1 + $0x128] sm:$0xff]
      %v291 = vld [vmem:[%s1 + $0x130] sm:$0xff]
      %v292 = vld [vmem:[%s1 + $0x138] sm:$0xff]
      %v293 = vld [vmem:[%s1 + $0x140] sm:$0xff]
      %v294 = vld [vmem:[%s1 + $0x148] sm:$0xff]
      %v295 = vld [vmem:[%s1 + $0x150] sm:$0xff]
      %v296 = vld [vmem:[%s1 + $0x158] sm:$0xff]
      %v297 = vld [vmem:[%s1 + $0x160] sm:$0xff]
      %v298 = vld [vmem:[%s1 + $0x168] sm:$0xff]
      %v299 = vld [vmem:[%s1 + $0x170] sm:$0xff]
      %v300 = vld [vmem:[%s1 + $0x178] sm:$0xff]
      %v301 = vld [vmem:[%s1 + $0x180] sm:$0xff]
      %v302 = vld [vmem:[%s1 + $0x188] sm:$0xff]
      %v303 = vld [vmem:[%s1 + $0x190] sm:$0xff]
      %v304 = vld [vmem:[%s1 + $0x198] sm:$0xff]
      %v305 = vld [vmem:[%s1 + $0x1a0] sm:$0xff]
      %v306 = vld [vmem:[%s1 + $0x1a8] sm:$0xff]
      %v307 = vld [vmem:[%s1 + $0x1b0] sm:$0xff]
      %v308 = vld [vmem:[%s1 + $0x1b8] sm:$0xff]
      %v309 = vld [vmem:[%s1 + $0x1c0] sm:$0xff]
      %v310 = vld [vmem:[%s1 + $0x1c8] sm:$0xff]
      %v311 = vld [vmem:[%s1 + $0x1d0] sm:$0xff]
      %v312 = vld [vmem:[%s1 + $0x1d8] sm:$0xff]
      %v313 = vld [vmem:[%s1 + $0x1e0] sm:$0xff]
      %v314 = vld [vmem:[%s1 + $0x1e8] sm:$0xff]
      %v315 = vld [vmem:[%s1 + $0x1f0] sm:$0xff]
      %v316 = vld [vmem:[%s1 + $0x1f8] sm:$0xff]
      %v317 = vld [vmem:[%s2] sm:$0xff]
      %v319 = vlaneseq
      %v320 = vshrl.u32 %v319, 7
      %v321 = vsub.s32 0, %v320
      %v322 = vrot.slane %v317, %v321
      %v323 = vlaneseq
      %v324 = vshrl.u32 %v323, 7
      %v325 = vsub.s32 1, %v324
      %v326 = vrot.slane %v317, %v325
      %v327 = vlaneseq
      %v328 = vshrl.u32 %v327, 7
      %v329 = vsub.s32 2, %v328
      %v330 = vrot.slane %v317, %v329
      %v331 = vlaneseq
      %v332 = vshrl.u32 %v331, 7
      %v333 = vsub.s32 3, %v332
      %v334 = vrot.slane %v317, %v333
      %v335 = vlaneseq
      %v336 = vshrl.u32 %v335, 7
      %v337 = vsub.s32 4, %v336
      %v338 = vrot.slane %v317, %v337
      %v339 = vlaneseq
      %v340 = vshrl.u32 %v339, 7
      %v341 = vsub.s32 5, %v340
      %v342 = vrot.slane %v317, %v341
      %v343 = vlaneseq
      %v344 = vshrl.u32 %v343, 7
      %v345 = vsub.s32 6, %v344
      %v346 = vrot.slane %v317, %v345
      %v347 = vlaneseq
      %v348 = vshrl.u32 %v347, 7
      %v349 = vsub.s32 7, %v348
      %v350 = vrot.slane %v317, %v349
      %v423 = vunpack.c.l.b16 %v253
      %v424 = vunpack.c.h.b16 %v253
      %v425 = vunpack.c.l.b16 %v254
      %v426 = vunpack.c.h.b16 %v254
      %v427 = vunpack.c.l.b16 %v255
      %v428 = vunpack.c.h.b16 %v255
      %v429 = vunpack.c.l.b16 %v256
      %v430 = vunpack.c.h.b16 %v256
      %v431 = vunpack.c.l.b16 %v257
      %v432 = vunpack.c.h.b16 %v257
      %v433 = vunpack.c.l.b16 %v258
      %v434 = vunpack.c.h.b16 %v258
      %v435 = vunpack.c.l.b16 %v259
      %v436 = vunpack.c.h.b16 %v259
      %v437 = vunpack.c.l.b16 %v260
      %v438 = vunpack.c.h.b16 %v260
      %v439 = vunpack.c.l.b16 %v261
      %v440 = vunpack.c.h.b16 %v261
      %v441 = vunpack.c.l.b16 %v262
      %v442 = vunpack.c.h.b16 %v262
      %v443 = vunpack.c.l.b16 %v263
      %v444 = vunpack.c.h.b16 %v263
      %v445 = vunpack.c.l.b16 %v264
      %v446 = vunpack.c.h.b16 %v264
      %v447 = vunpack.c.l.b16 %v265
      %v448 = vunpack.c.h.b16 %v265
      %v449 = vunpack.c.l.b16 %v266
      %v450 = vunpack.c.h.b16 %v266
      %v451 = vunpack.c.l.b16 %v267
      %v452 = vunpack.c.h.b16 %v267
      %v453 = vunpack.c.l.b16 %v268
      %v454 = vunpack.c.h.b16 %v268
      %v455 = vunpack.c.l.b16 %v269
      %v456 = vunpack.c.h.b16 %v269
      %v457 = vunpack.c.l.b16 %v270
      %v458 = vunpack.c.h.b16 %v270
      %v459 = vunpack.c.l.b16 %v271
      %v460 = vunpack.c.h.b16 %v271
      %v461 = vunpack.c.l.b16 %v272
      %v462 = vunpack.c.h.b16 %v272
      %v463 = vunpack.c.l.b16 %v273
      %v464 = vunpack.c.h.b16 %v273
      %v465 = vunpack.c.l.b16 %v274
      %v466 = vunpack.c.h.b16 %v274
      %v467 = vunpack.c.l.b16 %v275
      %v468 = vunpack.c.h.b16 %v275
      %v469 = vunpack.c.l.b16 %v276
      %v470 = vunpack.c.h.b16 %v276
      %v471 = vunpack.c.l.b16 %v277
      %v472 = vunpack.c.h.b16 %v277
      %v473 = vunpack.c.l.b16 %v278
      %v474 = vunpack.c.h.b16 %v278
      %v475 = vunpack.c.l.b16 %v279
      %v476 = vunpack.c.h.b16 %v279
      %v477 = vunpack.c.l.b16 %v280
      %v478 = vunpack.c.h.b16 %v280
      %v479 = vunpack.c.l.b16 %v281
      %v480 = vunpack.c.h.b16 %v281
      %v481 = vunpack.c.l.b16 %v282
      %v482 = vunpack.c.h.b16 %v282
      %v483 = vunpack.c.l.b16 %v283
      %v484 = vunpack.c.h.b16 %v283
      %v485 = vunpack.c.l.b16 %v284
      %v486 = vunpack.c.h.b16 %v284
      %v487 = vunpack.c.l.b16 %v285
      %v488 = vunpack.c.h.b16 %v285
      %v489 = vunpack.c.l.b16 %v286
      %v490 = vunpack.c.h.b16 %v286
      %v491 = vunpack.c.l.b16 %v287
      %v492 = vunpack.c.h.b16 %v287
      %v493 = vunpack.c.l.b16 %v288
      %v494 = vunpack.c.h.b16 %v288
      %v495 = vunpack.c.l.b16 %v289
      %v496 = vunpack.c.h.b16 %v289
      %v497 = vunpack.c.l.b16 %v290
      %v498 = vunpack.c.h.b16 %v290
      %v499 = vunpack.c.l.b16 %v291
      %v500 = vunpack.c.h.b16 %v291
      %v501 = vunpack.c.l.b16 %v292
      %v502 = vunpack.c.h.b16 %v292
      %v503 = vunpack.c.l.b16 %v293
      %v504 = vunpack.c.h.b16 %v293
      %v505 = vunpack.c.l.b16 %v294
      %v506 = vunpack.c.h.b16 %v294
      %v507 = vunpack.c.l.b16 %v295
      %v508 = vunpack.c.h.b16 %v295
      %v509 = vunpack.c.l.b16 %v296
      %v510 = vunpack.c.h.b16 %v296
      %v511 = vunpack.c.l.b16 %v297
      %v512 = vunpack.c.h.b16 %v297
      %v513 = vunpack.c.l.b16 %v298
      %v514 = vunpack.c.h.b16 %v298
      %v515 = vunpack.c.l.b16 %v299
      %v516 = vunpack.c.h.b16 %v299
      %v517 = vunpack.c.l.b16 %v300
      %v518 = vunpack.c.h.b16 %v300
      %v519 = vunpack.c.l.b16 %v301
      %v520 = vunpack.c.h.b16 %v301
      %v521 = vunpack.c.l.b16 %v302
      %v522 = vunpack.c.h.b16 %v302
      %v523 = vunpack.c.l.b16 %v303
      %v524 = vunpack.c.h.b16 %v303
      %v525 = vunpack.c.l.b16 %v304
      %v526 = vunpack.c.h.b16 %v304
      %v527 = vunpack.c.l.b16 %v305
      %v528 = vunpack.c.h.b16 %v305
      %v529 = vunpack.c.l.b16 %v306
      %v530 = vunpack.c.h.b16 %v306
      %v531 = vunpack.c.l.b16 %v307
      %v532 = vunpack.c.h.b16 %v307
      %v533 = vunpack.c.l.b16 %v308
      %v534 = vunpack.c.h.b16 %v308
      %v535 = vunpack.c.l.b16 %v309
      %v536 = vunpack.c.h.b16 %v309
      %v537 = vunpack.c.l.b16 %v310
      %v538 = vunpack.c.h.b16 %v310
      %v539 = vunpack.c.l.b16 %v311
      %v540 = vunpack.c.h.b16 %v311
      %v541 = vunpack.c.l.b16 %v312
      %v542 = vunpack.c.h.b16 %v312
      %v543 = vunpack.c.l.b16 %v313
      %v544 = vunpack.c.h.b16 %v313
      %v545 = vunpack.c.l.b16 %v314
      %v546 = vunpack.c.h.b16 %v314
      %v547 = vunpack.c.l.b16 %v315
      %v548 = vunpack.c.h.b16 %v315
      %v549 = vunpack.c.l.b16 %v316
      %v550 = vunpack.c.h.b16 %v316
      %v551 = vpack.c.b16 %v431, %v423
      %v552 = vpack.c.b16 %v432, %v424
      %v553 = vpack.c.b16 %v433, %v425
      %v554 = vpack.c.b16 %v434, %v426
      %v555 = vpack.c.b16 %v435, %v427
      %v556 = vpack.c.b16 %v436, %v428
      %v557 = vpack.c.b16 %v437, %v429
      %v558 = vpack.c.b16 %v438, %v430
      %v559 = vpack.c.b16 %v447, %v439
      %v560 = vpack.c.b16 %v448, %v440
      %v561 = vpack.c.b16 %v449, %v441
      %v562 = vpack.c.b16 %v450, %v442
      %v563 = vpack.c.b16 %v451, %v443
      %v564 = vpack.c.b16 %v452, %v444
      %v565 = vpack.c.b16 %v453, %v445
      %v566 = vpack.c.b16 %v454, %v446
      %v567 = vpack.c.b16 %v463, %v455
      %v568 = vpack.c.b16 %v464, %v456
      %v569 = vpack.c.b16 %v465, %v457
      %v570 = vpack.c.b16 %v466, %v458
      %v571 = vpack.c.b16 %v467, %v459
      %v572 = vpack.c.b16 %v468, %v460
      %v573 = vpack.c.b16 %v469, %v461
      %v574 = vpack.c.b16 %v470, %v462
      %v575 = vpack.c.b16 %v479, %v471
      %v576 = vpack.c.b16 %v480, %v472
      %v577 = vpack.c.b16 %v481, %v473
      %v578 = vpack.c.b16 %v482, %v474
      %v579 = vpack.c.b16 %v483, %v475
      %v580 = vpack.c.b16 %v484, %v476
      %v581 = vpack.c.b16 %v485, %v477
      %v582 = vpack.c.b16 %v486, %v478
      %v583 = vpack.c.b16 %v495, %v487
      %v584 = vpack.c.b16 %v496, %v488
      %v585 = vpack.c.b16 %v497, %v489
      %v586 = vpack.c.b16 %v498, %v490
      %v587 = vpack.c.b16 %v499, %v491
      %v588 = vpack.c.b16 %v500, %v492
      %v589 = vpack.c.b16 %v501, %v493
      %v590 = vpack.c.b16 %v502, %v494
      %v591 = vpack.c.b16 %v511, %v503
      %v592 = vpack.c.b16 %v512, %v504
      %v593 = vpack.c.b16 %v513, %v505
      %v594 = vpack.c.b16 %v514, %v506
      %v595 = vpack.c.b16 %v515, %v507
      %v596 = vpack.c.b16 %v516, %v508
      %v597 = vpack.c.b16 %v517, %v509
      %v598 = vpack.c.b16 %v518, %v510
      %v599 = vpack.c.b16 %v527, %v519
      %v600 = vpack.c.b16 %v528, %v520
      %v601 = vpack.c.b16 %v529, %v521
      %v602 = vpack.c.b16 %v530, %v522
      %v603 = vpack.c.b16 %v531, %v523
      %v604 = vpack.c.b16 %v532, %v524
      %v605 = vpack.c.b16 %v533, %v525
      %v606 = vpack.c.b16 %v534, %v526
      %v607 = vpack.c.b16 %v543, %v535
      %v608 = vpack.c.b16 %v544, %v536
      %v609 = vpack.c.b16 %v545, %v537
      %v610 = vpack.c.b16 %v546, %v538
      %v611 = vpack.c.b16 %v547, %v539
      %v612 = vpack.c.b16 %v548, %v540
      %v613 = vpack.c.b16 %v549, %v541
      %v614 = vpack.c.b16 %v550, %v542
      %679 = vmatprep.subr.bf16.mxu0 %v608
      %680 = vmatpush1.bf16.msra.mxu0 %v607
      %681 = vmatprep.subr.bf16.mxu0 %v600
      %682 = vmatpush1.bf16.msra.mxu0 %v599
      %683 = vmatprep.subr.bf16.mxu0 %v592
      %684 = vmatpush1.bf16.msra.mxu0 %v591
      %685 = vmatprep.subr.bf16.mxu0 %v584
      %686 = vmatpush1.bf16.msra.mxu0 %v583
      %687 = vmatprep.subr.bf16.mxu0 %v576
      %688 = vmatpush1.bf16.msra.mxu0 %v575
      %689 = vmatprep.subr.bf16.mxu0 %v568
      %690 = vmatpush1.bf16.msra.mxu0 %v567
      %691 = vmatprep.subr.bf16.mxu0 %v560
      %692 = vmatpush1.bf16.msra.mxu0 %v559
      %693 = vmatprep.subr.bf16.mxu0 %v552
      %694 = vmatpush1.bf16.msra.mxu0 %v551
      %695 = vmatprep.subr.bf16.mxu0 0
      %696 = vmatpush2.bf16.msra.mxu0 0
      %697 = vmatprep.subr.bf16.mxu0 0
      %698 = vmatpush2.bf16.msra.mxu0 0
      %699 = vmatprep.subr.bf16.mxu0 0
      %700 = vmatpush2.bf16.msra.mxu0 0
      %701 = vmatprep.subr.bf16.mxu0 0
      %702 = vmatpush2.bf16.msra.mxu0 0
      %703 = vmatprep.subr.bf16.mxu0 0
      %704 = vmatpush2.bf16.msra.mxu0 0
      %705 = vmatprep.subr.bf16.mxu0 0
      %706 = vmatpush2.bf16.msra.mxu0 0
      %707 = vmatprep.subr.bf16.mxu0 0
      %708 = vmatpush2.bf16.msra.mxu0 0
      %709 = vmatprep.subr.bf16.mxu0 0
      %710 = vmatpush2.bf16.msra.mxu0 0
      %711 = vmatprep.mubr.bf16.mxu0 0
      %712 = vmatmul.mubr.bf16.gmra.mxu0 %v245
      %v713 = vpop.f32.mrf.mxu0
      %v714 = vadd.f32 %v322, %v713
      %v715 = vpop.f32.mrf.mxu0
      %v716 = vadd.f32 %v326, %v715
      %v717 = vpop.f32.mrf.mxu0
      %v718 = vadd.f32 %v322, %v717
      %v719 = vpop.f32.mrf.mxu0
      %v720 = vadd.f32 %v326, %v719
      %721 = vmatprep.mubr.bf16.mxu0 0
      %722 = vmatmul.mubr.bf16.gmra.mxu0 %v246
      %v723 = vpop.f32.mrf.mxu0
      %v724 = vadd.f32 %v322, %v723
      %v725 = vpop.f32.mrf.mxu0
      %v726 = vadd.f32 %v326, %v725
      %v727 = vpop.f32.mrf.mxu0
      %v728 = vadd.f32 %v322, %v727
      %v729 = vpop.f32.mrf.mxu0
      %v730 = vadd.f32 %v326, %v729
      %731 = vmatprep.mubr.bf16.mxu0 0
      %732 = vmatmul.mubr.bf16.gmra.mxu0 %v247
      %v733 = vpop.f32.mrf.mxu0
      %v734 = vadd.f32 %v322, %v733
      %v735 = vpop.f32.mrf.mxu0
      %v736 = vadd.f32 %v326, %v735
      %v737 = vpop.f32.mrf.mxu0
      %v738 = vadd.f32 %v322, %v737
      %v739 = vpop.f32.mrf.mxu0
      %v740 = vadd.f32 %v326, %v739
      %741 = vmatprep.mubr.bf16.mxu0 0
      %742 = vmatmul.mubr.bf16.gmra.mxu0 %v248
      %v743 = vpop.f32.mrf.mxu0
      %v744 = vadd.f32 %v322, %v743
      %v745 = vpop.f32.mrf.mxu0
      %v746 = vadd.f32 %v326, %v745
      %v747 = vpop.f32.mrf.mxu0
      %v748 = vadd.f32 %v322, %v747
      %v749 = vpop.f32.mrf.mxu0
      %v750 = vadd.f32 %v326, %v749
      %751 = vmatprep.mubr.bf16.mxu0 0
      %752 = vmatmul.mubr.bf16.gmra.mxu0 %v249
      %v753 = vpop.f32.mrf.mxu0
      %v754 = vadd.f32 %v322, %v753
      %v755 = vpop.f32.mrf.mxu0
      %v756 = vadd.f32 %v326, %v755
      %v757 = vpop.f32.mrf.mxu0
      %v758 = vadd.f32 %v322, %v757
      %v759 = vpop.f32.mrf.mxu0
      %v760 = vadd.f32 %v326, %v759
      %761 = vmatprep.mubr.bf16.mxu0 0
      %762 = vmatmul.mubr.bf16.gmra.mxu0 %v250
      %v763 = vpop.f32.mrf.mxu0
      %v764 = vadd.f32 %v322, %v763
      %v765 = vpop.f32.mrf.mxu0
      %v766 = vadd.f32 %v326, %v765
      %v767 = vpop.f32.mrf.mxu0
      %v768 = vadd.f32 %v322, %v767
      %v769 = vpop.f32.mrf.mxu0
      %v770 = vadd.f32 %v326, %v769
      %771 = vmatprep.mubr.bf16.mxu0 0
      %772 = vmatmul.mubr.bf16.gmra.mxu0 %v251
      %v773 = vpop.f32.mrf.mxu0
      %v774 = vadd.f32 %v322, %v773
      %v775 = vpop.f32.mrf.mxu0
      %v776 = vadd.f32 %v326, %v775
      %v777 = vpop.f32.mrf.mxu0
      %v778 = vadd.f32 %v322, %v777
      %v779 = vpop.f32.mrf.mxu0
      %v780 = vadd.f32 %v326, %v779
      %781 = vmatprep.mubr.bf16.mxu0 0
      %782 = vmatmul.mubr.bf16.gmra.mxu0 %v252
      %v783 = vpop.f32.mrf.mxu0
      %v784 = vadd.f32 %v322, %v783
      %v785 = vpop.f32.mrf.mxu0
      %v786 = vadd.f32 %v326, %v785
      %v787 = vpop.f32.mrf.mxu0
      %v788 = vadd.f32 %v322, %v787
      %v789 = vpop.f32.mrf.mxu0
      %v790 = vadd.f32 %v326, %v789
      %791 = vdwg.mxu0
      %792 = vmatprep.subr.bf16.mxu0 %v610
      %793 = vmatpush1.bf16.msra.mxu0 %v609
      %794 = vmatprep.subr.bf16.mxu0 %v602
      %795 = vmatpush1.bf16.msra.mxu0 %v601
      %796 = vmatprep.subr.bf16.mxu0 %v594
      %797 = vmatpush1.bf16.msra.mxu0 %v593
      %798 = vmatprep.subr.bf16.mxu0 %v586
      %799 = vmatpush1.bf16.msra.mxu0 %v585
      %800 = vmatprep.subr.bf16.mxu0 %v578
      %801 = vmatpush1.bf16.msra.mxu0 %v577
      %802 = vmatprep.subr.bf16.mxu0 %v570
      %803 = vmatpush1.bf16.msra.mxu0 %v569
      %804 = vmatprep.subr.bf16.mxu0 %v562
      %805 = vmatpush1.bf16.msra.mxu0 %v561
      %806 = vmatprep.subr.bf16.mxu0 %v554
      %807 = vmatpush1.bf16.msra.mxu0 %v553
      %808 = vmatprep.subr.bf16.mxu0 0
      %809 = vmatpush2.bf16.msra.mxu0 0
      %810 = vmatprep.subr.bf16.mxu0 0
      %811 = vmatpush2.bf16.msra.mxu0 0
      %812 = vmatprep.subr.bf16.mxu0 0
      %813 = vmatpush2.bf16.msra.mxu0 0
      %814 = vmatprep.subr.bf16.mxu0 0
      %815 = vmatpush2.bf16.msra.mxu0 0
      %816 = vmatprep.subr.bf16.mxu0 0
      %817 = vmatpush2.bf16.msra.mxu0 0
      %818 = vmatprep.subr.bf16.mxu0 0
      %819 = vmatpush2.bf16.msra.mxu0 0
      %820 = vmatprep.subr.bf16.mxu0 0
      %821 = vmatpush2.bf16.msra.mxu0 0
      %822 = vmatprep.subr.bf16.mxu0 0
      %823 = vmatpush2.bf16.msra.mxu0 0
      %824 = vmatprep.mubr.bf16.mxu0 0
      %825 = vmatmul.mubr.bf16.gmra.mxu0 %v245
      %v826 = vpop.f32.mrf.mxu0
      %v827 = vadd.f32 %v330, %v826
      %v828 = vpop.f32.mrf.mxu0
      %v829 = vadd.f32 %v334, %v828
      %v830 = vpop.f32.mrf.mxu0
      %v831 = vadd.f32 %v330, %v830
      %v832 = vpop.f32.mrf.mxu0
      %v833 = vadd.f32 %v334, %v832
      %834 = vmatprep.mubr.bf16.mxu0 0
      %835 = vmatmul.mubr.bf16.gmra.mxu0 %v246
      %v836 = vpop.f32.mrf.mxu0
      %v837 = vadd.f32 %v330, %v836
      %v838 = vpop.f32.mrf.mxu0
      %v839 = vadd.f32 %v334, %v838
      %v840 = vpop.f32.mrf.mxu0
      %v841 = vadd.f32 %v330, %v840
      %v842 = vpop.f32.mrf.mxu0
      %v843 = vadd.f32 %v334, %v842
      %844 = vmatprep.mubr.bf16.mxu0 0
      %845 = vmatmul.mubr.bf16.gmra.mxu0 %v247
      %v846 = vpop.f32.mrf.mxu0
      %v847 = vadd.f32 %v330, %v846
      %v848 = vpop.f32.mrf.mxu0
      %v849 = vadd.f32 %v334, %v848
      %v850 = vpop.f32.mrf.mxu0
      %v851 = vadd.f32 %v330, %v850
      %v852 = vpop.f32.mrf.mxu0
      %v853 = vadd.f32 %v334, %v852
      %854 = vmatprep.mubr.bf16.mxu0 0
      %855 = vmatmul.mubr.bf16.gmra.mxu0 %v248
      %v856 = vpop.f32.mrf.mxu0
      %v857 = vadd.f32 %v330, %v856
      %v858 = vpop.f32.mrf.mxu0
      %v859 = vadd.f32 %v334, %v858
      %v860 = vpop.f32.mrf.mxu0
      %v861 = vadd.f32 %v330, %v860
      %v862 = vpop.f32.mrf.mxu0
      %v863 = vadd.f32 %v334, %v862
      %864 = vmatprep.mubr.bf16.mxu0 0
      %865 = vmatmul.mubr.bf16.gmra.mxu0 %v249
      %v866 = vpop.f32.mrf.mxu0
      %v867 = vadd.f32 %v330, %v866
      %v868 = vpop.f32.mrf.mxu0
      %v869 = vadd.f32 %v334, %v868
      %v870 = vpop.f32.mrf.mxu0
      %v871 = vadd.f32 %v330, %v870
      %v872 = vpop.f32.mrf.mxu0
      %v873 = vadd.f32 %v334, %v872
      %874 = vmatprep.mubr.bf16.mxu0 0
      %875 = vmatmul.mubr.bf16.gmra.mxu0 %v250
      %v876 = vpop.f32.mrf.mxu0
      %v877 = vadd.f32 %v330, %v876
      %v878 = vpop.f32.mrf.mxu0
      %v879 = vadd.f32 %v334, %v878
      %v880 = vpop.f32.mrf.mxu0
      %v881 = vadd.f32 %v330, %v880
      %v882 = vpop.f32.mrf.mxu0
      %v883 = vadd.f32 %v334, %v882
      %884 = vmatprep.mubr.bf16.mxu0 0
      %885 = vmatmul.mubr.bf16.gmra.mxu0 %v251
      %v886 = vpop.f32.mrf.mxu0
      %v887 = vadd.f32 %v330, %v886
      %v888 = vpop.f32.mrf.mxu0
      %v889 = vadd.f32 %v334, %v888
      %v890 = vpop.f32.mrf.mxu0
      %v891 = vadd.f32 %v330, %v890
      %v892 = vpop.f32.mrf.mxu0
      %v893 = vadd.f32 %v334, %v892
      %894 = vmatprep.mubr.bf16.mxu0 0
      %895 = vmatmul.mubr.bf16.gmra.mxu0 %v252
      %v896 = vpop.f32.mrf.mxu0
      %v897 = vadd.f32 %v330, %v896
      %v898 = vpop.f32.mrf.mxu0
      %v899 = vadd.f32 %v334, %v898
      %v900 = vpop.f32.mrf.mxu0
      %v901 = vadd.f32 %v330, %v900
      %v902 = vpop.f32.mrf.mxu0
      %v903 = vadd.f32 %v334, %v902
      %904 = vdwg.mxu0
      %905 = vmatprep.subr.bf16.mxu0 %v612
      %906 = vmatpush1.bf16.msra.mxu0 %v611
      %907 = vmatprep.subr.bf16.mxu0 %v604
      %908 = vmatpush1.bf16.msra.mxu0 %v603
      %909 = vmatprep.subr.bf16.mxu0 %v596
      %910 = vmatpush1.bf16.msra.mxu0 %v595
      %911 = vmatprep.subr.bf16.mxu0 %v588
      %912 = vmatpush1.bf16.msra.mxu0 %v587
      %913 = vmatprep.subr.bf16.mxu0 %v580
      %914 = vmatpush1.bf16.msra.mxu0 %v579
      %915 = vmatprep.subr.bf16.mxu0 %v572
      %916 = vmatpush1.bf16.msra.mxu0 %v571
      %917 = vmatprep.subr.bf16.mxu0 %v564
      %918 = vmatpush1.bf16.msra.mxu0 %v563
      %919 = vmatprep.subr.bf16.mxu0 %v556
      %920 = vmatpush1.bf16.msra.mxu0 %v555
      %921 = vmatprep.subr.bf16.mxu0 0
      %922 = vmatpush2.bf16.msra.mxu0 0
      %923 = vmatprep.subr.bf16.mxu0 0
      %924 = vmatpush2.bf16.msra.mxu0 0
      %925 = vmatprep.subr.bf16.mxu0 0
      %926 = vmatpush2.bf16.msra.mxu0 0
      %927 = vmatprep.subr.bf16.mxu0 0
      %928 = vmatpush2.bf16.msra.mxu0 0
      %929 = vmatprep.subr.bf16.mxu0 0
      %930 = vmatpush2.bf16.msra.mxu0 0
      %931 = vmatprep.subr.bf16.mxu0 0
      %932 = vmatpush2.bf16.msra.mxu0 0
      %933 = vmatprep.subr.bf16.mxu0 0
      %934 = vmatpush2.bf16.msra.mxu0 0
      %935 = vmatprep.subr.bf16.mxu0 0
      %936 = vmatpush2.bf16.msra.mxu0 0
      %937 = vmatprep.mubr.bf16.mxu0 0
      %938 = vmatmul.mubr.bf16.gmra.mxu0 %v245
      %v939 = vpop.f32.mrf.mxu0
      %v940 = vadd.f32 %v338, %v939
      %v941 = vpop.f32.mrf.mxu0
      %v942 = vadd.f32 %v342, %v941
      %v943 = vpop.f32.mrf.mxu0
      %v944 = vadd.f32 %v338, %v943
      %v945 = vpop.f32.mrf.mxu0
      %v946 = vadd.f32 %v342, %v945
      %947 = vmatprep.mubr.bf16.mxu0 0
      %948 = vmatmul.mubr.bf16.gmra.mxu0 %v246
      %v949 = vpop.f32.mrf.mxu0
      %v950 = vadd.f32 %v338, %v949
      %v951 = vpop.f32.mrf.mxu0
      %v952 = vadd.f32 %v342, %v951
      %v953 = vpop.f32.mrf.mxu0
      %v954 = vadd.f32 %v338, %v953
      %v955 = vpop.f32.mrf.mxu0
      %v956 = vadd.f32 %v342, %v955
      %957 = vmatprep.mubr.bf16.mxu0 0
      %958 = vmatmul.mubr.bf16.gmra.mxu0 %v247
      %v959 = vpop.f32.mrf.mxu0
      %v960 = vadd.f32 %v338, %v959
      %v961 = vpop.f32.mrf.mxu0
      %v962 = vadd.f32 %v342, %v961
      %v963 = vpop.f32.mrf.mxu0
      %v964 = vadd.f32 %v338, %v963
      %v965 = vpop.f32.mrf.mxu0
      %v966 = vadd.f32 %v342, %v965
      %967 = vmatprep.mubr.bf16.mxu0 0
      %968 = vmatmul.mubr.bf16.gmra.mxu0 %v248
      %v969 = vpop.f32.mrf.mxu0
      %v970 = vadd.f32 %v338, %v969
      %v971 = vpop.f32.mrf.mxu0
      %v972 = vadd.f32 %v342, %v971
      %v973 = vpop.f32.mrf.mxu0
      %v974 = vadd.f32 %v338, %v973
      %v975 = vpop.f32.mrf.mxu0
      %v976 = vadd.f32 %v342, %v975
      %977 = vmatprep.mubr.bf16.mxu0 0
      %978 = vmatmul.mubr.bf16.gmra.mxu0 %v249
      %v979 = vpop.f32.mrf.mxu0
      %v980 = vadd.f32 %v338, %v979
      %v981 = vpop.f32.mrf.mxu0
      %v982 = vadd.f32 %v342, %v981
      %v983 = vpop.f32.mrf.mxu0
      %v984 = vadd.f32 %v338, %v983
      %v985 = vpop.f32.mrf.mxu0
      %v986 = vadd.f32 %v342, %v985
      %987 = vmatprep.mubr.bf16.mxu0 0
      %988 = vmatmul.mubr.bf16.gmra.mxu0 %v250
      %v989 = vpop.f32.mrf.mxu0
      %v990 = vadd.f32 %v338, %v989
      %v991 = vpop.f32.mrf.mxu0
      %v992 = vadd.f32 %v342, %v991
      %v993 = vpop.f32.mrf.mxu0
      %v994 = vadd.f32 %v338, %v993
      %v995 = vpop.f32.mrf.mxu0
      %v996 = vadd.f32 %v342, %v995
      %997 = vmatprep.mubr.bf16.mxu0 0
      %998 = vmatmul.mubr.bf16.gmra.mxu0 %v251
      %v999 = vpop.f32.mrf.mxu0
      %v1000 = vadd.f32 %v338, %v999
      %v1001 = vpop.f32.mrf.mxu0
      %v1002 = vadd.f32 %v342, %v1001
      %v1003 = vpop.f32.mrf.mxu0
      %v1004 = vadd.f32 %v338, %v1003
      %v1005 = vpop.f32.mrf.mxu0
      %v1006 = vadd.f32 %v342, %v1005
      %1007 = vmatprep.mubr.bf16.mxu0 0
      %1008 = vmatmul.mubr.bf16.gmra.mxu0 %v252
      %v1009 = vpop.f32.mrf.mxu0
      %v1010 = vadd.f32 %v338, %v1009
      %v1011 = vpop.f32.mrf.mxu0
      %v1012 = vadd.f32 %v342, %v1011
      %v1013 = vpop.f32.mrf.mxu0
      %v1014 = vadd.f32 %v338, %v1013
      %v1015 = vpop.f32.mrf.mxu0
      %v1016 = vadd.f32 %v342, %v1015
      %1017 = vdwg.mxu0
      %1018 = vmatprep.subr.bf16.mxu0 %v614
      %1019 = vmatpush1.bf16.msra.mxu0 %v613
      %1020 = vmatprep.subr.bf16.mxu0 %v606
      %1021 = vmatpush1.bf16.msra.mxu0 %v605
      %1022 = vmatprep.subr.bf16.mxu0 %v598
      %1023 = vmatpush1.bf16.msra.mxu0 %v597
      %1024 = vmatprep.subr.bf16.mxu0 %v590
      %1025 = vmatpush1.bf16.msra.mxu0 %v589
      %1026 = vmatprep.subr.bf16.mxu0 %v582
      %1027 = vmatpush1.bf16.msra.mxu0 %v581
      %1028 = vmatprep.subr.bf16.mxu0 %v574
      %1029 = vmatpush1.bf16.msra.mxu0 %v573
      %1030 = vmatprep.subr.bf16.mxu0 %v566
      %1031 = vmatpush1.bf16.msra.mxu0 %v565
      %1032 = vmatprep.subr.bf16.mxu0 %v558
      %1033 = vmatpush1.bf16.msra.mxu0 %v557
      %1034 = vmatprep.subr.bf16.mxu0 0
      %1035 = vmatpush2.bf16.msra.mxu0 0
      %1036 = vmatprep.subr.bf16.mxu0 0
      %1037 = vmatpush2.bf16.msra.mxu0 0
      %1038 = vmatprep.subr.bf16.mxu0 0
      %1039 = vmatpush2.bf16.msra.mxu0 0
      %1040 = vmatprep.subr.bf16.mxu0 0
      %1041 = vmatpush2.bf16.msra.mxu0 0
      %1042 = vmatprep.subr.bf16.mxu0 0
      %1043 = vmatpush2.bf16.msra.mxu0 0
      %1044 = vmatprep.subr.bf16.mxu0 0
      %1045 = vmatpush2.bf16.msra.mxu0 0
      %1046 = vmatprep.subr.bf16.mxu0 0
      %1047 = vmatpush2.bf16.msra.mxu0 0
      %1048 = vmatprep.subr.bf16.mxu0 0
      %1049 = vmatpush2.bf16.msra.mxu0 0
      %1050 = vmatprep.mubr.bf16.mxu0 0
      %1051 = vmatmul.mubr.bf16.gmra.mxu0 %v245
      %v1052 = vpop.f32.mrf.mxu0
      %v1053 = vadd.f32 %v346, %v1052
      %v1054 = vpop.f32.mrf.mxu0
      %v1055 = vadd.f32 %v350, %v1054
      %v1056 = vpop.f32.mrf.mxu0
      %v1057 = vadd.f32 %v346, %v1056
      %v1058 = vpop.f32.mrf.mxu0
      %v1059 = vadd.f32 %v350, %v1058
      %1060 = vmatprep.mubr.bf16.mxu0 0
      %1061 = vmatmul.mubr.bf16.gmra.mxu0 %v246
      %v1062 = vpop.f32.mrf.mxu0
      %v1063 = vadd.f32 %v346, %v1062
      %v1064 = vpop.f32.mrf.mxu0
      %v1065 = vadd.f32 %v350, %v1064
      %v1066 = vpop.f32.mrf.mxu0
      %v1067 = vadd.f32 %v346, %v1066
      %v1068 = vpop.f32.mrf.mxu0
      %v1069 = vadd.f32 %v350, %v1068
      %1070 = vmatprep.mubr.bf16.mxu0 0
      %1071 = vmatmul.mubr.bf16.gmra.mxu0 %v247
      %v1072 = vpop.f32.mrf.mxu0
      %v1073 = vadd.f32 %v346, %v1072
      %v1074 = vpop.f32.mrf.mxu0
      %v1075 = vadd.f32 %v350, %v1074
      %v1076 = vpop.f32.mrf.mxu0
      %v1077 = vadd.f32 %v346, %v1076
      %v1078 = vpop.f32.mrf.mxu0
      %v1079 = vadd.f32 %v350, %v1078
      %1080 = vmatprep.mubr.bf16.mxu0 0
      %1081 = vmatmul.mubr.bf16.gmra.mxu0 %v248
      %v1082 = vpop.f32.mrf.mxu0
      %v1083 = vadd.f32 %v346, %v1082
      %v1084 = vpop.f32.mrf.mxu0
      %v1085 = vadd.f32 %v350, %v1084
      %v1086 = vpop.f32.mrf.mxu0
      %v1087 = vadd.f32 %v346, %v1086
      %v1088 = vpop.f32.mrf.mxu0
      %v1089 = vadd.f32 %v350, %v1088
      %1090 = vmatprep.mubr.bf16.mxu0 0
      %1091 = vmatmul.mubr.bf16.gmra.mxu0 %v249
      %v1092 = vpop.f32.mrf.mxu0
      %v1093 = vadd.f32 %v346, %v1092
      %v1094 = vpop.f32.mrf.mxu0
      %v1095 = vadd.f32 %v350, %v1094
      %v1096 = vpop.f32.mrf.mxu0
      %v1097 = vadd.f32 %v346, %v1096
      %v1098 = vpop.f32.mrf.mxu0
      %v1099 = vadd.f32 %v350, %v1098
      %1100 = vmatprep.mubr.bf16.mxu0 0
      %1101 = vmatmul.mubr.bf16.gmra.mxu0 %v250
      %v1102 = vpop.f32.mrf.mxu0
      %v1103 = vadd.f32 %v346, %v1102
      %v1104 = vpop.f32.mrf.mxu0
      %v1105 = vadd.f32 %v350, %v1104
      %v1106 = vpop.f32.mrf.mxu0
      %v1107 = vadd.f32 %v346, %v1106
      %v1108 = vpop.f32.mrf.mxu0
      %v1109 = vadd.f32 %v350, %v1108
      %1110 = vmatprep.mubr.bf16.mxu0 0
      %1111 = vmatmul.mubr.bf16.gmra.mxu0 %v251
      %v1112 = vpop.f32.mrf.mxu0
      %v1113 = vadd.f32 %v346, %v1112
      %v1114 = vpop.f32.mrf.mxu0
      %v1115 = vadd.f32 %v350, %v1114
      %v1116 = vpop.f32.mrf.mxu0
      %v1117 = vadd.f32 %v346, %v1116
      %v1118 = vpop.f32.mrf.mxu0
      %v1119 = vadd.f32 %v350, %v1118
      %1120 = vmatprep.mubr.bf16.mxu0 0
      %1121 = vmatmul.mubr.bf16.gmra.mxu0 %v252
      %v1122 = vpop.f32.mrf.mxu0
      %v1123 = vadd.f32 %v346, %v1122
      %v1124 = vpop.f32.mrf.mxu0
      %v1125 = vadd.f32 %v350, %v1124
      %v1126 = vpop.f32.mrf.mxu0
      %v1127 = vadd.f32 %v346, %v1126
      %v1128 = vpop.f32.mrf.mxu0
      %v1129 = vadd.f32 %v350, %v1128
      %1130 = vdwg.mxu0
      %v1131 = vmax.f32 %v714, 0.0
      %v1132 = vmax.f32 %v716, 0.0
      %v1133 = vmax.f32 %v827, 0.0
      %v1134 = vmax.f32 %v829, 0.0
      %v1135 = vmax.f32 %v940, 0.0
      %v1136 = vmax.f32 %v942, 0.0
      %v1137 = vmax.f32 %v1053, 0.0
      %v1138 = vmax.f32 %v1055, 0.0
      %v1139 = vmax.f32 %v718, 0.0
      %v1140 = vmax.f32 %v720, 0.0
      %v1141 = vmax.f32 %v831, 0.0
      %v1142 = vmax.f32 %v833, 0.0
      %v1143 = vmax.f32 %v944, 0.0
      %v1144 = vmax.f32 %v946, 0.0
      %v1145 = vmax.f32 %v1057, 0.0
      %v1146 = vmax.f32 %v1059, 0.0
      %v1147 = vmax.f32 %v724, 0.0
      %v1148 = vmax.f32 %v726, 0.0
      %v1149 = vmax.f32 %v837, 0.0
      %v1150 = vmax.f32 %v839, 0.0
      %v1151 = vmax.f32 %v950, 0.0
      %v1152 = vmax.f32 %v952, 0.0
      %v1153 = vmax.f32 %v1063, 0.0
      %v1154 = vmax.f32 %v1065, 0.0
      %v1155 = vmax.f32 %v728, 0.0
      %v1156 = vmax.f32 %v730, 0.0
      %v1157 = vmax.f32 %v841, 0.0
      %v1158 = vmax.f32 %v843, 0.0
      %v1159 = vmax.f32 %v954, 0.0
      %v1160 = vmax.f32 %v956, 0.0
      %v1161 = vmax.f32 %v1067, 0.0
      %v1162 = vmax.f32 %v1069, 0.0
      %v1163 = vmax.f32 %v734, 0.0
      %v1164 = vmax.f32 %v736, 0.0
      %v1165 = vmax.f32 %v847, 0.0
      %v1166 = vmax.f32 %v849, 0.0
      %v1167 = vmax.f32 %v960, 0.0
      %v1168 = vmax.f32 %v962, 0.0
      %v1169 = vmax.f32 %v1073, 0.0
      %v1170 = vmax.f32 %v1075, 0.0
      %v1171 = vmax.f32 %v738, 0.0
      %v1172 = vmax.f32 %v740, 0.0
      %v1173 = vmax.f32 %v851, 0.0
      %v1174 = vmax.f32 %v853, 0.0
      %v1175 = vmax.f32 %v964, 0.0
      %v1176 = vmax.f32 %v966, 0.0
      %v1177 = vmax.f32 %v1077, 0.0
      %v1178 = vmax.f32 %v1079, 0.0
      %v1179 = vmax.f32 %v744, 0.0
      %v1180 = vmax.f32 %v746, 0.0
      %v1181 = vmax.f32 %v857, 0.0
      %v1182 = vmax.f32 %v859, 0.0
      %v1183 = vmax.f32 %v970, 0.0
      %v1184 = vmax.f32 %v972, 0.0
      %v1185 = vmax.f32 %v1083, 0.0
      %v1186 = vmax.f32 %v1085, 0.0
      %v1187 = vmax.f32 %v748, 0.0
      %v1188 = vmax.f32 %v750, 0.0
      %v1189 = vmax.f32 %v861, 0.0
      %v1190 = vmax.f32 %v863, 0.0
      %v1191 = vmax.f32 %v974, 0.0
      %v1192 = vmax.f32 %v976, 0.0
      %v1193 = vmax.f32 %v1087, 0.0
      %v1194 = vmax.f32 %v1089, 0.0
      %v1195 = vmax.f32 %v754, 0.0
      %v1196 = vmax.f32 %v756, 0.0
      %v1197 = vmax.f32 %v867, 0.0
      %v1198 = vmax.f32 %v869, 0.0
      %v1199 = vmax.f32 %v980, 0.0
      %v1200 = vmax.f32 %v982, 0.0
      %v1201 = vmax.f32 %v1093, 0.0
      %v1202 = vmax.f32 %v1095, 0.0
      %v1203 = vmax.f32 %v758, 0.0
      %v1204 = vmax.f32 %v760, 0.0
      %v1205 = vmax.f32 %v871, 0.0
      %v1206 = vmax.f32 %v873, 0.0
      %v1207 = vmax.f32 %v984, 0.0
      %v1208 = vmax.f32 %v986, 0.0
      %v1209 = vmax.f32 %v1097, 0.0
      %v1210 = vmax.f32 %v1099, 0.0
      %v1211 = vmax.f32 %v764, 0.0
      %v1212 = vmax.f32 %v766, 0.0
      %v1213 = vmax.f32 %v877, 0.0
      %v1214 = vmax.f32 %v879, 0.0
      %v1215 = vmax.f32 %v990, 0.0
      %v1216 = vmax.f32 %v992, 0.0
      %v1217 = vmax.f32 %v1103, 0.0
      %v1218 = vmax.f32 %v1105, 0.0
      %v1219 = vmax.f32 %v768, 0.0
      %v1220 = vmax.f32 %v770, 0.0
      %v1221 = vmax.f32 %v881, 0.0
      %v1222 = vmax.f32 %v883, 0.0
      %v1223 = vmax.f32 %v994, 0.0
      %v1224 = vmax.f32 %v996, 0.0
      %v1225 = vmax.f32 %v1107, 0.0
      %v1226 = vmax.f32 %v1109, 0.0
      %v1227 = vmax.f32 %v774, 0.0
      %v1228 = vmax.f32 %v776, 0.0
      %v1229 = vmax.f32 %v887, 0.0
      %v1230 = vmax.f32 %v889, 0.0
      %v1231 = vmax.f32 %v1000, 0.0
      %v1232 = vmax.f32 %v1002, 0.0
      %v1233 = vmax.f32 %v1113, 0.0
      %v1234 = vmax.f32 %v1115, 0.0
      %v1235 = vmax.f32 %v778, 0.0
      %v1236 = vmax.f32 %v780, 0.0
      %v1237 = vmax.f32 %v891, 0.0
      %v1238 = vmax.f32 %v893, 0.0
      %v1239 = vmax.f32 %v1004, 0.0
      %v1240 = vmax.f32 %v1006, 0.0
      %v1241 = vmax.f32 %v1117, 0.0
      %v1242 = vmax.f32 %v1119, 0.0
      %v1243 = vmax.f32 %v784, 0.0
      %v1244 = vmax.f32 %v786, 0.0
      %v1245 = vmax.f32 %v897, 0.0
      %v1246 = vmax.f32 %v899, 0.0
      %v1247 = vmax.f32 %v1010, 0.0
      %v1248 = vmax.f32 %v1012, 0.0
      %v1249 = vmax.f32 %v1123, 0.0
      %v1250 = vmax.f32 %v1125, 0.0
      %v1251 = vmax.f32 %v788, 0.0
      %v1252 = vmax.f32 %v790, 0.0
      %v1253 = vmax.f32 %v901, 0.0
      %v1254 = vmax.f32 %v903, 0.0
      %v1255 = vmax.f32 %v1014, 0.0
      %v1256 = vmax.f32 %v1016, 0.0
      %v1257 = vmax.f32 %v1127, 0.0
      %v1258 = vmax.f32 %v1129, 0.0
      %v1259 = vpack.c.bf16 %v1139, %v1131
      %v1260 = vpack.c.bf16 %v1140, %v1132
      %v1261 = vpack.c.bf16 %v1141, %v1133
      %v1262 = vpack.c.bf16 %v1142, %v1134
      %v1263 = vpack.c.bf16 %v1143, %v1135
      %v1264 = vpack.c.bf16 %v1144, %v1136
      %v1265 = vpack.c.bf16 %v1145, %v1137
      %v1266 = vpack.c.bf16 %v1146, %v1138
      %v1267 = vpack.c.bf16 %v1155, %v1147
      %v1268 = vpack.c.bf16 %v1156, %v1148
      %v1269 = vpack.c.bf16 %v1157, %v1149
      %v1270 = vpack.c.bf16 %v1158, %v1150
      %v1271 = vpack.c.bf16 %v1159, %v1151
      %v1272 = vpack.c.bf16 %v1160, %v1152
      %v1273 = vpack.c.bf16 %v1161, %v1153
      %v1274 = vpack.c.bf16 %v1162, %v1154
      %v1275 = vpack.c.bf16 %v1171, %v1163
      %v1276 = vpack.c.bf16 %v1172, %v1164
      %v1277 = vpack.c.bf16 %v1173, %v1165
      %v1278 = vpack.c.bf16 %v1174, %v1166
      %v1279 = vpack.c.bf16 %v1175, %v1167
      %v1280 = vpack.c.bf16 %v1176, %v1168
      %v1281 = vpack.c.bf16 %v1177, %v1169
      %v1282 = vpack.c.bf16 %v1178, %v1170
      %v1283 = vpack.c.bf16 %v1187, %v1179
      %v1284 = vpack.c.bf16 %v1188, %v1180
      %v1285 = vpack.c.bf16 %v1189, %v1181
      %v1286 = vpack.c.bf16 %v1190, %v1182
      %v1287 = vpack.c.bf16 %v1191, %v1183
      %v1288 = vpack.c.bf16 %v1192, %v1184
      %v1289 = vpack.c.bf16 %v1193, %v1185
      %v1290 = vpack.c.bf16 %v1194, %v1186
      %v1291 = vpack.c.bf16 %v1203, %v1195
      %v1292 = vpack.c.bf16 %v1204, %v1196
      %v1293 = vpack.c.bf16 %v1205, %v1197
      %v1294 = vpack.c.bf16 %v1206, %v1198
      %v1295 = vpack.c.bf16 %v1207, %v1199
      %v1296 = vpack.c.bf16 %v1208, %v1200
      %v1297 = vpack.c.bf16 %v1209, %v1201
      %v1298 = vpack.c.bf16 %v1210, %v1202
      %v1299 = vpack.c.bf16 %v1219, %v1211
      %v1300 = vpack.c.bf16 %v1220, %v1212
      %v1301 = vpack.c.bf16 %v1221, %v1213
      %v1302 = vpack.c.bf16 %v1222, %v1214
      %v1303 = vpack.c.bf16 %v1223, %v1215
      %v1304 = vpack.c.bf16 %v1224, %v1216
      %v1305 = vpack.c.bf16 %v1225, %v1217
      %v1306 = vpack.c.bf16 %v1226, %v1218
      %v1307 = vpack.c.bf16 %v1235, %v1227
      %v1308 = vpack.c.bf16 %v1236, %v1228
      %v1309 = vpack.c.bf16 %v1237, %v1229
      %v1310 = vpack.c.bf16 %v1238, %v1230
      %v1311 = vpack.c.bf16 %v1239, %v1231
      %v1312 = vpack.c.bf16 %v1240, %v1232
      %v1313 = vpack.c.bf16 %v1241, %v1233
      %v1314 = vpack.c.bf16 %v1242, %v1234
      %v1315 = vpack.c.bf16 %v1251, %v1243
      %v1316 = vpack.c.bf16 %v1252, %v1244
      %v1317 = vpack.c.bf16 %v1253, %v1245
      %v1318 = vpack.c.bf16 %v1254, %v1246
      %v1319 = vpack.c.bf16 %v1255, %v1247
      %v1320 = vpack.c.bf16 %v1256, %v1248
      %v1321 = vpack.c.bf16 %v1257, %v1249
      %v1322 = vpack.c.bf16 %v1258, %v1250
      %v1323 = vld [vmem:[%s3] sm:$0xf]
      %v1324 = vld [vmem:[%s3 + $0x4] sm:$0xf]
      %v1325 = vld [vmem:[%s3 + $0x8] sm:$0xf]
      %v1326 = vld [vmem:[%s3 + $0xc] sm:$0xf]
      %v1327 = vld [vmem:[%s3 + $0x10] sm:$0xf]
      %v1328 = vld [vmem:[%s3 + $0x14] sm:$0xf]
      %v1329 = vld [vmem:[%s3 + $0x18] sm:$0xf]
      %v1330 = vld [vmem:[%s3 + $0x1c] sm:$0xf]
      %v1331 = vld [vmem:[%s3 + $0x20] sm:$0xf]
      %v1332 = vld [vmem:[%s3 + $0x24] sm:$0xf]
      %v1333 = vld [vmem:[%s3 + $0x28] sm:$0xf]
      %v1334 = vld [vmem:[%s3 + $0x2c] sm:$0xf]
      %v1335 = vld [vmem:[%s3 + $0x30] sm:$0xf]
      %v1336 = vld [vmem:[%s3 + $0x34] sm:$0xf]
      %v1337 = vld [vmem:[%s3 + $0x38] sm:$0xf]
      %v1338 = vld [vmem:[%s3 + $0x3c] sm:$0xf]
      %v1339 = vld [vmem:[%s3 + $0x40] sm:$0xf]
      %v1340 = vld [vmem:[%s3 + $0x44] sm:$0xf]
      %v1341 = vld [vmem:[%s3 + $0x48] sm:$0xf]
      %v1342 = vld [vmem:[%s3 + $0x4c] sm:$0xf]
      %v1343 = vld [vmem:[%s3 + $0x50] sm:$0xf]
      %v1344 = vld [vmem:[%s3 + $0x54] sm:$0xf]
      %v1345 = vld [vmem:[%s3 + $0x58] sm:$0xf]
      %v1346 = vld [vmem:[%s3 + $0x5c] sm:$0xf]
      %v1347 = vld [vmem:[%s3 + $0x60] sm:$0xf]
      %v1348 = vld [vmem:[%s3 + $0x64] sm:$0xf]
      %v1349 = vld [vmem:[%s3 + $0x68] sm:$0xf]
      %v1350 = vld [vmem:[%s3 + $0x6c] sm:$0xf]
      %v1351 = vld [vmem:[%s3 + $0x70] sm:$0xf]
      %v1352 = vld [vmem:[%s3 + $0x74] sm:$0xf]
      %v1353 = vld [vmem:[%s3 + $0x78] sm:$0xf]
      %v1354 = vld [vmem:[%s3 + $0x7c] sm:$0xf]
      %v1355 = vld [vmem:[%s3 + $0x80] sm:$0xf]
      %v1356 = vld [vmem:[%s3 + $0x84] sm:$0xf]
      %v1357 = vld [vmem:[%s3 + $0x88] sm:$0xf]
      %v1358 = vld [vmem:[%s3 + $0x8c] sm:$0xf]
      %v1359 = vld [vmem:[%s3 + $0x90] sm:$0xf]
      %v1360 = vld [vmem:[%s3 + $0x94] sm:$0xf]
      %v1361 = vld [vmem:[%s3 + $0x98] sm:$0xf]
      %v1362 = vld [vmem:[%s3 + $0x9c] sm:$0xf]
      %v1363 = vld [vmem:[%s3 + $0xa0] sm:$0xf]
      %v1364 = vld [vmem:[%s3 + $0xa4] sm:$0xf]
      %v1365 = vld [vmem:[%s3 + $0xa8] sm:$0xf]
      %v1366 = vld [vmem:[%s3 + $0xac] sm:$0xf]
      %v1367 = vld [vmem:[%s3 + $0xb0] sm:$0xf]
      %v1368 = vld [vmem:[%s3 + $0xb4] sm:$0xf]
      %v1369 = vld [vmem:[%s3 + $0xb8] sm:$0xf]
      %v1370 = vld [vmem:[%s3 + $0xbc] sm:$0xf]
      %v1371 = vld [vmem:[%s3 + $0xc0] sm:$0xf]
      %v1372 = vld [vmem:[%s3 + $0xc4] sm:$0xf]
      %v1373 = vld [vmem:[%s3 + $0xc8] sm:$0xf]
      %v1374 = vld [vmem:[%s3 + $0xcc] sm:$0xf]
      %v1375 = vld [vmem:[%s3 + $0xd0] sm:$0xf]
      %v1376 = vld [vmem:[%s3 + $0xd4] sm:$0xf]
      %v1377 = vld [vmem:[%s3 + $0xd8] sm:$0xf]
      %v1378 = vld [vmem:[%s3 + $0xdc] sm:$0xf]
      %v1379 = vld [vmem:[%s3 + $0xe0] sm:$0xf]
      %v1380 = vld [vmem:[%s3 + $0xe4] sm:$0xf]
      %v1381 = vld [vmem:[%s3 + $0xe8] sm:$0xf]
      %v1382 = vld [vmem:[%s3 + $0xec] sm:$0xf]
      %v1383 = vld [vmem:[%s3 + $0xf0] sm:$0xf]
      %v1384 = vld [vmem:[%s3 + $0xf4] sm:$0xf]
      %v1385 = vld [vmem:[%s3 + $0xf8] sm:$0xf]
      %v1386 = vld [vmem:[%s3 + $0xfc] sm:$0xf]
      %v1387 = vld [vmem:[%s3 + $0x100] sm:$0xf]
      %v1388 = vld [vmem:[%s3 + $0x104] sm:$0xf]
      %v1389 = vld [vmem:[%s3 + $0x108] sm:$0xf]
      %v1390 = vld [vmem:[%s3 + $0x10c] sm:$0xf]
      %v1391 = vld [vmem:[%s3 + $0x110] sm:$0xf]
      %v1392 = vld [vmem:[%s3 + $0x114] sm:$0xf]
      %v1393 = vld [vmem:[%s3 + $0x118] sm:$0xf]
      %v1394 = vld [vmem:[%s3 + $0x11c] sm:$0xf]
      %v1395 = vld [vmem:[%s3 + $0x120] sm:$0xf]
      %v1396 = vld [vmem:[%s3 + $0x124] sm:$0xf]
      %v1397 = vld [vmem:[%s3 + $0x128] sm:$0xf]
      %v1398 = vld [vmem:[%s3 + $0x12c] sm:$0xf]
      %v1399 = vld [vmem:[%s3 + $0x130] sm:$0xf]
      %v1400 = vld [vmem:[%s3 + $0x134] sm:$0xf]
      %v1401 = vld [vmem:[%s3 + $0x138] sm:$0xf]
      %v1402 = vld [vmem:[%s3 + $0x13c] sm:$0xf]
      %v1403 = vld [vmem:[%s3 + $0x140] sm:$0xf]
      %v1404 = vld [vmem:[%s3 + $0x144] sm:$0xf]
      %v1405 = vld [vmem:[%s3 + $0x148] sm:$0xf]
      %v1406 = vld [vmem:[%s3 + $0x14c] sm:$0xf]
      %v1407 = vld [vmem:[%s3 + $0x150] sm:$0xf]
      %v1408 = vld [vmem:[%s3 + $0x154] sm:$0xf]
      %v1409 = vld [vmem:[%s3 + $0x158] sm:$0xf]
      %v1410 = vld [vmem:[%s3 + $0x15c] sm:$0xf]
      %v1411 = vld [vmem:[%s3 + $0x160] sm:$0xf]
      %v1412 = vld [vmem:[%s3 + $0x164] sm:$0xf]
      %v1413 = vld [vmem:[%s3 + $0x168] sm:$0xf]
      %v1414 = vld [vmem:[%s3 + $0x16c] sm:$0xf]
      %v1415 = vld [vmem:[%s3 + $0x170] sm:$0xf]
      %v1416 = vld [vmem:[%s3 + $0x174] sm:$0xf]
      %v1417 = vld [vmem:[%s3 + $0x178] sm:$0xf]
      %v1418 = vld [vmem:[%s3 + $0x17c] sm:$0xf]
      %v1419 = vld [vmem:[%s3 + $0x180] sm:$0xf]
      %v1420 = vld [vmem:[%s3 + $0x184] sm:$0xf]
      %v1421 = vld [vmem:[%s3 + $0x188] sm:$0xf]
      %v1422 = vld [vmem:[%s3 + $0x18c] sm:$0xf]
      %v1423 = vld [vmem:[%s3 + $0x190] sm:$0xf]
      %v1424 = vld [vmem:[%s3 + $0x194] sm:$0xf]
      %v1425 = vld [vmem:[%s3 + $0x198] sm:$0xf]
      %v1426 = vld [vmem:[%s3 + $0x19c] sm:$0xf]
      %v1427 = vld [vmem:[%s3 + $0x1a0] sm:$0xf]
      %v1428 = vld [vmem:[%s3 + $0x1a4] sm:$0xf]
      %v1429 = vld [vmem:[%s3 + $0x1a8] sm:$0xf]
      %v1430 = vld [vmem:[%s3 + $0x1ac] sm:$0xf]
      %v1431 = vld [vmem:[%s3 + $0x1b0] sm:$0xf]
      %v1432 = vld [vmem:[%s3 + $0x1b4] sm:$0xf]
      %v1433 = vld [vmem:[%s3 + $0x1b8] sm:$0xf]
      %v1434 = vld [vmem:[%s3 + $0x1bc] sm:$0xf]
      %v1435 = vld [vmem:[%s3 + $0x1c0] sm:$0xf]
      %v1436 = vld [vmem:[%s3 + $0x1c4] sm:$0xf]
      %v1437 = vld [vmem:[%s3 + $0x1c8] sm:$0xf]
      %v1438 = vld [vmem:[%s3 + $0x1cc] sm:$0xf]
      %v1439 = vld [vmem:[%s3 + $0x1d0] sm:$0xf]
      %v1440 = vld [vmem:[%s3 + $0x1d4] sm:$0xf]
      %v1441 = vld [vmem:[%s3 + $0x1d8] sm:$0xf]
      %v1442 = vld [vmem:[%s3 + $0x1dc] sm:$0xf]
      %v1443 = vld [vmem:[%s3 + $0x1e0] sm:$0xf]
      %v1444 = vld [vmem:[%s3 + $0x1e4] sm:$0xf]
      %v1445 = vld [vmem:[%s3 + $0x1e8] sm:$0xf]
      %v1446 = vld [vmem:[%s3 + $0x1ec] sm:$0xf]
      %v1447 = vld [vmem:[%s3 + $0x1f0] sm:$0xf]
      %v1448 = vld [vmem:[%s3 + $0x1f4] sm:$0xf]
      %v1449 = vld [vmem:[%s3 + $0x1f8] sm:$0xf]
      %v1450 = vld [vmem:[%s3 + $0x1fc] sm:$0xf]
      %v1451 = vld [vmem:[%s4] sm:$0x1]
      %v1453 = vlaneseq
      %v1454 = vshrl.u32 %v1453, 7
      %v1455 = vsub.s32 0, %v1454
      %v1456 = vrot.slane %v1451, %v1455
      %v1586 = vunpack.c.l.b16 %v1323
      %v1587 = vunpack.c.l.b16 %v1324
      %v1588 = vunpack.c.l.b16 %v1325
      %v1589 = vunpack.c.l.b16 %v1326
      %v1590 = vunpack.c.l.b16 %v1327
      %v1591 = vunpack.c.l.b16 %v1328
      %v1592 = vunpack.c.l.b16 %v1329
      %v1593 = vunpack.c.l.b16 %v1330
      %v1594 = vunpack.c.l.b16 %v1331
      %v1595 = vunpack.c.l.b16 %v1332
      %v1596 = vunpack.c.l.b16 %v1333
      %v1597 = vunpack.c.l.b16 %v1334
      %v1598 = vunpack.c.l.b16 %v1335
      %v1599 = vunpack.c.l.b16 %v1336
      %v1600 = vunpack.c.l.b16 %v1337
      %v1601 = vunpack.c.l.b16 %v1338
      %v1602 = vunpack.c.l.b16 %v1339
      %v1603 = vunpack.c.l.b16 %v1340
      %v1604 = vunpack.c.l.b16 %v1341
      %v1605 = vunpack.c.l.b16 %v1342
      %v1606 = vunpack.c.l.b16 %v1343
      %v1607 = vunpack.c.l.b16 %v1344
      %v1608 = vunpack.c.l.b16 %v1345
      %v1609 = vunpack.c.l.b16 %v1346
      %v1610 = vunpack.c.l.b16 %v1347
      %v1611 = vunpack.c.l.b16 %v1348
      %v1612 = vunpack.c.l.b16 %v1349
      %v1613 = vunpack.c.l.b16 %v1350
      %v1614 = vunpack.c.l.b16 %v1351
      %v1615 = vunpack.c.l.b16 %v1352
      %v1616 = vunpack.c.l.b16 %v1353
      %v1617 = vunpack.c.l.b16 %v1354
      %v1618 = vunpack.c.l.b16 %v1355
      %v1619 = vunpack.c.l.b16 %v1356
      %v1620 = vunpack.c.l.b16 %v1357
      %v1621 = vunpack.c.l.b16 %v1358
      %v1622 = vunpack.c.l.b16 %v1359
      %v1623 = vunpack.c.l.b16 %v1360
      %v1624 = vunpack.c.l.b16 %v1361
      %v1625 = vunpack.c.l.b16 %v1362
      %v1626 = vunpack.c.l.b16 %v1363
      %v1627 = vunpack.c.l.b16 %v1364
      %v1628 = vunpack.c.l.b16 %v1365
      %v1629 = vunpack.c.l.b16 %v1366
      %v1630 = vunpack.c.l.b16 %v1367
      %v1631 = vunpack.c.l.b16 %v1368
      %v1632 = vunpack.c.l.b16 %v1369
      %v1633 = vunpack.c.l.b16 %v1370
      %v1634 = vunpack.c.l.b16 %v1371
      %v1635 = vunpack.c.l.b16 %v1372
      %v1636 = vunpack.c.l.b16 %v1373
      %v1637 = vunpack.c.l.b16 %v1374
      %v1638 = vunpack.c.l.b16 %v1375
      %v1639 = vunpack.c.l.b16 %v1376
      %v1640 = vunpack.c.l.b16 %v1377
      %v1641 = vunpack.c.l.b16 %v1378
      %v1642 = vunpack.c.l.b16 %v1379
      %v1643 = vunpack.c.l.b16 %v1380
      %v1644 = vunpack.c.l.b16 %v1381
      %v1645 = vunpack.c.l.b16 %v1382
      %v1646 = vunpack.c.l.b16 %v1383
      %v1647 = vunpack.c.l.b16 %v1384
      %v1648 = vunpack.c.l.b16 %v1385
      %v1649 = vunpack.c.l.b16 %v1386
      %v1650 = vunpack.c.l.b16 %v1387
      %v1651 = vunpack.c.l.b16 %v1388
      %v1652 = vunpack.c.l.b16 %v1389
      %v1653 = vunpack.c.l.b16 %v1390
      %v1654 = vunpack.c.l.b16 %v1391
      %v1655 = vunpack.c.l.b16 %v1392
      %v1656 = vunpack.c.l.b16 %v1393
      %v1657 = vunpack.c.l.b16 %v1394
      %v1658 = vunpack.c.l.b16 %v1395
      %v1659 = vunpack.c.l.b16 %v1396
      %v1660 = vunpack.c.l.b16 %v1397
      %v1661 = vunpack.c.l.b16 %v1398
      %v1662 = vunpack.c.l.b16 %v1399
      %v1663 = vunpack.c.l.b16 %v1400
      %v1664 = vunpack.c.l.b16 %v1401
      %v1665 = vunpack.c.l.b16 %v1402
      %v1666 = vunpack.c.l.b16 %v1403
      %v1667 = vunpack.c.l.b16 %v1404
      %v1668 = vunpack.c.l.b16 %v1405
      %v1669 = vunpack.c.l.b16 %v1406
      %v1670 = vunpack.c.l.b16 %v1407
      %v1671 = vunpack.c.l.b16 %v1408
      %v1672 = vunpack.c.l.b16 %v1409
      %v1673 = vunpack.c.l.b16 %v1410
      %v1674 = vunpack.c.l.b16 %v1411
      %v1675 = vunpack.c.l.b16 %v1412
      %v1676 = vunpack.c.l.b16 %v1413
      %v1677 = vunpack.c.l.b16 %v1414
      %v1678 = vunpack.c.l.b16 %v1415
      %v1679 = vunpack.c.l.b16 %v1416
      %v1680 = vunpack.c.l.b16 %v1417
      %v1681 = vunpack.c.l.b16 %v1418
      %v1682 = vunpack.c.l.b16 %v1419
      %v1683 = vunpack.c.l.b16 %v1420
      %v1684 = vunpack.c.l.b16 %v1421
      %v1685 = vunpack.c.l.b16 %v1422
      %v1686 = vunpack.c.l.b16 %v1423
      %v1687 = vunpack.c.l.b16 %v1424
      %v1688 = vunpack.c.l.b16 %v1425
      %v1689 = vunpack.c.l.b16 %v1426
      %v1690 = vunpack.c.l.b16 %v1427
      %v1691 = vunpack.c.l.b16 %v1428
      %v1692 = vunpack.c.l.b16 %v1429
      %v1693 = vunpack.c.l.b16 %v1430
      %v1694 = vunpack.c.l.b16 %v1431
      %v1695 = vunpack.c.l.b16 %v1432
      %v1696 = vunpack.c.l.b16 %v1433
      %v1697 = vunpack.c.l.b16 %v1434
      %v1698 = vunpack.c.l.b16 %v1435
      %v1699 = vunpack.c.l.b16 %v1436
      %v1700 = vunpack.c.l.b16 %v1437
      %v1701 = vunpack.c.l.b16 %v1438
      %v1702 = vunpack.c.l.b16 %v1439
      %v1703 = vunpack.c.l.b16 %v1440
      %v1704 = vunpack.c.l.b16 %v1441
      %v1705 = vunpack.c.l.b16 %v1442
      %v1706 = vunpack.c.l.b16 %v1443
      %v1707 = vunpack.c.l.b16 %v1444
      %v1708 = vunpack.c.l.b16 %v1445
      %v1709 = vunpack.c.l.b16 %v1446
      %v1710 = vunpack.c.l.b16 %v1447
      %v1711 = vunpack.c.l.b16 %v1448
      %v1712 = vunpack.c.l.b16 %v1449
      %v1713 = vunpack.c.l.b16 %v1450
      %v1714 = vpack.c.b16 %v1587, %v1586
      %v1715 = vpack.c.b16 %v1589, %v1588
      %v1716 = vpack.c.b16 %v1591, %v1590
      %v1717 = vpack.c.b16 %v1593, %v1592
      %v1718 = vpack.c.b16 %v1595, %v1594
      %v1719 = vpack.c.b16 %v1597, %v1596
      %v1720 = vpack.c.b16 %v1599, %v1598
      %v1721 = vpack.c.b16 %v1601, %v1600
      %v1722 = vpack.c.b16 %v1603, %v1602
      %v1723 = vpack.c.b16 %v1605, %v1604
      %v1724 = vpack.c.b16 %v1607, %v1606
      %v1725 = vpack.c.b16 %v1609, %v1608
      %v1726 = vpack.c.b16 %v1611, %v1610
      %v1727 = vpack.c.b16 %v1613, %v1612
      %v1728 = vpack.c.b16 %v1615, %v1614
      %v1729 = vpack.c.b16 %v1617, %v1616
      %v1730 = vpack.c.b16 %v1619, %v1618
      %v1731 = vpack.c.b16 %v1621, %v1620
      %v1732 = vpack.c.b16 %v1623, %v1622
      %v1733 = vpack.c.b16 %v1625, %v1624
      %v1734 = vpack.c.b16 %v1627, %v1626
      %v1735 = vpack.c.b16 %v1629, %v1628
      %v1736 = vpack.c.b16 %v1631, %v1630
      %v1737 = vpack.c.b16 %v1633, %v1632
      %v1738 = vpack.c.b16 %v1635, %v1634
      %v1739 = vpack.c.b16 %v1637, %v1636
      %v1740 = vpack.c.b16 %v1639, %v1638
      %v1741 = vpack.c.b16 %v1641, %v1640
      %v1742 = vpack.c.b16 %v1643, %v1642
      %v1743 = vpack.c.b16 %v1645, %v1644
      %v1744 = vpack.c.b16 %v1647, %v1646
      %v1745 = vpack.c.b16 %v1649, %v1648
      %v1746 = vpack.c.b16 %v1651, %v1650
      %v1747 = vpack.c.b16 %v1653, %v1652
      %v1748 = vpack.c.b16 %v1655, %v1654
      %v1749 = vpack.c.b16 %v1657, %v1656
      %v1750 = vpack.c.b16 %v1659, %v1658
      %v1751 = vpack.c.b16 %v1661, %v1660
      %v1752 = vpack.c.b16 %v1663, %v1662
      %v1753 = vpack.c.b16 %v1665, %v1664
      %v1754 = vpack.c.b16 %v1667, %v1666
      %v1755 = vpack.c.b16 %v1669, %v1668
      %v1756 = vpack.c.b16 %v1671, %v1670
      %v1757 = vpack.c.b16 %v1673, %v1672
      %v1758 = vpack.c.b16 %v1675, %v1674
      %v1759 = vpack.c.b16 %v1677, %v1676
      %v1760 = vpack.c.b16 %v1679, %v1678
      %v1761 = vpack.c.b16 %v1681, %v1680
      %v1762 = vpack.c.b16 %v1683, %v1682
      %v1763 = vpack.c.b16 %v1685, %v1684
      %v1764 = vpack.c.b16 %v1687, %v1686
      %v1765 = vpack.c.b16 %v1689, %v1688
      %v1766 = vpack.c.b16 %v1691, %v1690
      %v1767 = vpack.c.b16 %v1693, %v1692
      %v1768 = vpack.c.b16 %v1695, %v1694
      %v1769 = vpack.c.b16 %v1697, %v1696
      %v1770 = vpack.c.b16 %v1699, %v1698
      %v1771 = vpack.c.b16 %v1701, %v1700
      %v1772 = vpack.c.b16 %v1703, %v1702
      %v1773 = vpack.c.b16 %v1705, %v1704
      %v1774 = vpack.c.b16 %v1707, %v1706
      %v1775 = vpack.c.b16 %v1709, %v1708
      %v1776 = vpack.c.b16 %v1711, %v1710
      %v1777 = vpack.c.b16 %v1713, %v1712
      %1842 = vmatprep.subr.bf16.mxu0 0
      %1843 = vmatpush1.bf16.msra.mxu0 %v1721
      %1844 = vmatprep.subr.bf16.mxu0 0
      %1845 = vmatpush1.bf16.msra.mxu0 %v1720
      %1846 = vmatprep.subr.bf16.mxu0 0
      %1847 = vmatpush1.bf16.msra.mxu0 %v1719
      %1848 = vmatprep.subr.bf16.mxu0 0
      %1849 = vmatpush1.bf16.msra.mxu0 %v1718
      %1850 = vmatprep.subr.bf16.mxu0 0
      %1851 = vmatpush1.bf16.msra.mxu0 %v1717
      %1852 = vmatprep.subr.bf16.mxu0 0
      %1853 = vmatpush1.bf16.msra.mxu0 %v1716
      %1854 = vmatprep.subr.bf16.mxu0 0
      %1855 = vmatpush1.bf16.msra.mxu0 %v1715
      %1856 = vmatprep.subr.bf16.mxu0 0
      %1857 = vmatpush1.bf16.msra.mxu0 %v1714
      %1858 = vmatprep.subr.bf16.mxu0 0
      %1859 = vmatpush2.bf16.msra.mxu0 %v1729
      %1860 = vmatprep.subr.bf16.mxu0 0
      %1861 = vmatpush2.bf16.msra.mxu0 %v1728
      %1862 = vmatprep.subr.bf16.mxu0 0
      %1863 = vmatpush2.bf16.msra.mxu0 %v1727
      %1864 = vmatprep.subr.bf16.mxu0 0
      %1865 = vmatpush2.bf16.msra.mxu0 %v1726
      %1866 = vmatprep.subr.bf16.mxu0 0
      %1867 = vmatpush2.bf16.msra.mxu0 %v1725
      %1868 = vmatprep.subr.bf16.mxu0 0
      %1869 = vmatpush2.bf16.msra.mxu0 %v1724
      %1870 = vmatprep.subr.bf16.mxu0 0
      %1871 = vmatpush2.bf16.msra.mxu0 %v1723
      %1872 = vmatprep.subr.bf16.mxu0 0
      %1873 = vmatpush2.bf16.msra.mxu0 %v1722
      %1874 = vmatprep.mubr.bf16.mxu0 %v1260
      %1875 = vmatmul.mubr.bf16.gmra.mxu0 %v1259
      %v1876 = vpop.f32.mrf.mxu0
      %v1877 = vadd.f32 %v1456, %v1876
      %v1878 = vpop.f32.mrf.mxu0
      %v1879 = vpop.f32.mrf.mxu0
      %v1880 = vadd.f32 %v1456, %v1879
      %v1881 = vpop.f32.mrf.mxu0
      %1882 = vmatprep.mubr.bf16.mxu0 %v1268
      %1883 = vmatmul.mubr.bf16.gmra.mxu0 %v1267
      %v1884 = vpop.f32.mrf.mxu0
      %v1885 = vadd.f32 %v1456, %v1884
      %v1886 = vpop.f32.mrf.mxu0
      %v1887 = vpop.f32.mrf.mxu0
      %v1888 = vadd.f32 %v1456, %v1887
      %v1889 = vpop.f32.mrf.mxu0
      %1890 = vmatprep.mubr.bf16.mxu0 %v1276
      %1891 = vmatmul.mubr.bf16.gmra.mxu0 %v1275
      %v1892 = vpop.f32.mrf.mxu0
      %v1893 = vadd.f32 %v1456, %v1892
      %v1894 = vpop.f32.mrf.mxu0
      %v1895 = vpop.f32.mrf.mxu0
      %v1896 = vadd.f32 %v1456, %v1895
      %v1897 = vpop.f32.mrf.mxu0
      %1898 = vmatprep.mubr.bf16.mxu0 %v1284
      %1899 = vmatmul.mubr.bf16.gmra.mxu0 %v1283
      %v1900 = vpop.f32.mrf.mxu0
      %v1901 = vadd.f32 %v1456, %v1900
      %v1902 = vpop.f32.mrf.mxu0
      %v1903 = vpop.f32.mrf.mxu0
      %v1904 = vadd.f32 %v1456, %v1903
      %v1905 = vpop.f32.mrf.mxu0
      %1906 = vmatprep.mubr.bf16.mxu0 %v1292
      %1907 = vmatmul.mubr.bf16.gmra.mxu0 %v1291
      %v1908 = vpop.f32.mrf.mxu0
      %v1909 = vadd.f32 %v1456, %v1908
      %v1910 = vpop.f32.mrf.mxu0
      %v1911 = vpop.f32.mrf.mxu0
      %v1912 = vadd.f32 %v1456, %v1911
      %v1913 = vpop.f32.mrf.mxu0
      %1914 = vmatprep.mubr.bf16.mxu0 %v1300
      %1915 = vmatmul.mubr.bf16.gmra.mxu0 %v1299
      %v1916 = vpop.f32.mrf.mxu0
      %v1917 = vadd.f32 %v1456, %v1916
      %v1918 = vpop.f32.mrf.mxu0
      %v1919 = vpop.f32.mrf.mxu0
      %v1920 = vadd.f32 %v1456, %v1919
      %v1921 = vpop.f32.mrf.mxu0
      %1922 = vmatprep.mubr.bf16.mxu0 %v1308
      %1923 = vmatmul.mubr.bf16.gmra.mxu0 %v1307
      %v1924 = vpop.f32.mrf.mxu0
      %v1925 = vadd.f32 %v1456, %v1924
      %v1926 = vpop.f32.mrf.mxu0
      %v1927 = vpop.f32.mrf.mxu0
      %v1928 = vadd.f32 %v1456, %v1927
      %v1929 = vpop.f32.mrf.mxu0
      %1930 = vmatprep.mubr.bf16.mxu0 %v1316
      %1931 = vmatmul.mubr.bf16.gmra.mxu0 %v1315
      %v1932 = vpop.f32.mrf.mxu0
      %v1933 = vadd.f32 %v1456, %v1932
      %v1934 = vpop.f32.mrf.mxu0
      %v1935 = vpop.f32.mrf.mxu0
      %v1936 = vadd.f32 %v1456, %v1935
      %v1937 = vpop.f32.mrf.mxu0
      %1938 = vdwg.mxu0
      %1939 = vmatprep.subr.bf16.mxu0 0
      %1940 = vmatpush1.bf16.msra.mxu0 %v1737
      %1941 = vmatprep.subr.bf16.mxu0 0
      %1942 = vmatpush1.bf16.msra.mxu0 %v1736
      %1943 = vmatprep.subr.bf16.mxu0 0
      %1944 = vmatpush1.bf16.msra.mxu0 %v1735
      %1945 = vmatprep.subr.bf16.mxu0 0
      %1946 = vmatpush1.bf16.msra.mxu0 %v1734
      %1947 = vmatprep.subr.bf16.mxu0 0
      %1948 = vmatpush1.bf16.msra.mxu0 %v1733
      %1949 = vmatprep.subr.bf16.mxu0 0
      %1950 = vmatpush1.bf16.msra.mxu0 %v1732
      %1951 = vmatprep.subr.bf16.mxu0 0
      %1952 = vmatpush1.bf16.msra.mxu0 %v1731
      %1953 = vmatprep.subr.bf16.mxu0 0
      %1954 = vmatpush1.bf16.msra.mxu0 %v1730
      %1955 = vmatprep.subr.bf16.mxu0 0
      %1956 = vmatpush2.bf16.msra.mxu0 %v1745
      %1957 = vmatprep.subr.bf16.mxu0 0
      %1958 = vmatpush2.bf16.msra.mxu0 %v1744
      %1959 = vmatprep.subr.bf16.mxu0 0
      %1960 = vmatpush2.bf16.msra.mxu0 %v1743
      %1961 = vmatprep.subr.bf16.mxu0 0
      %1962 = vmatpush2.bf16.msra.mxu0 %v1742
      %1963 = vmatprep.subr.bf16.mxu0 0
      %1964 = vmatpush2.bf16.msra.mxu0 %v1741
      %1965 = vmatprep.subr.bf16.mxu0 0
      %1966 = vmatpush2.bf16.msra.mxu0 %v1740
      %1967 = vmatprep.subr.bf16.mxu0 0
      %1968 = vmatpush2.bf16.msra.mxu0 %v1739
      %1969 = vmatprep.subr.bf16.mxu0 0
      %1970 = vmatpush2.bf16.msra.mxu0 %v1738
      %1971 = vmatprep.mubr.bf16.mxu0 %v1262
      %1972 = vmatmul.mubr.bf16.gmra.mxu0 %v1261
      %v1973 = vpop.f32.mrf.mxu0
      %v1974 = vadd.f32 %v1877, %v1973
      %v1975 = vpop.f32.mrf.mxu0
      %v1976 = vpop.f32.mrf.mxu0
      %v1977 = vadd.f32 %v1880, %v1976
      %v1978 = vpop.f32.mrf.mxu0
      %1979 = vmatprep.mubr.bf16.mxu0 %v1270
      %1980 = vmatmul.mubr.bf16.gmra.mxu0 %v1269
      %v1981 = vpop.f32.mrf.mxu0
      %v1982 = vadd.f32 %v1885, %v1981
      %v1983 = vpop.f32.mrf.mxu0
      %v1984 = vpop.f32.mrf.mxu0
      %v1985 = vadd.f32 %v1888, %v1984
      %v1986 = vpop.f32.mrf.mxu0
      %1987 = vmatprep.mubr.bf16.mxu0 %v1278
      %1988 = vmatmul.mubr.bf16.gmra.mxu0 %v1277
      %v1989 = vpop.f32.mrf.mxu0
      %v1990 = vadd.f32 %v1893, %v1989
      %v1991 = vpop.f32.mrf.mxu0
      %v1992 = vpop.f32.mrf.mxu0
      %v1993 = vadd.f32 %v1896, %v1992
      %v1994 = vpop.f32.mrf.mxu0
      %1995 = vmatprep.mubr.bf16.mxu0 %v1286
      %1996 = vmatmul.mubr.bf16.gmra.mxu0 %v1285
      %v1997 = vpop.f32.mrf.mxu0
      %v1998 = vadd.f32 %v1901, %v1997
      %v1999 = vpop.f32.mrf.mxu0
      %v2000 = vpop.f32.mrf.mxu0
      %v2001 = vadd.f32 %v1904, %v2000
      %v2002 = vpop.f32.mrf.mxu0
      %2003 = vmatprep.mubr.bf16.mxu0 %v1294
      %2004 = vmatmul.mubr.bf16.gmra.mxu0 %v1293
      %v2005 = vpop.f32.mrf.mxu0
      %v2006 = vadd.f32 %v1909, %v2005
      %v2007 = vpop.f32.mrf.mxu0
      %v2008 = vpop.f32.mrf.mxu0
      %v2009 = vadd.f32 %v1912, %v2008
      %v2010 = vpop.f32.mrf.mxu0
      %2011 = vmatprep.mubr.bf16.mxu0 %v1302
      %2012 = vmatmul.mubr.bf16.gmra.mxu0 %v1301
      %v2013 = vpop.f32.mrf.mxu0
      %v2014 = vadd.f32 %v1917, %v2013
      %v2015 = vpop.f32.mrf.mxu0
      %v2016 = vpop.f32.mrf.mxu0
      %v2017 = vadd.f32 %v1920, %v2016
      %v2018 = vpop.f32.mrf.mxu0
      %2019 = vmatprep.mubr.bf16.mxu0 %v1310
      %2020 = vmatmul.mubr.bf16.gmra.mxu0 %v1309
      %v2021 = vpop.f32.mrf.mxu0
      %v2022 = vadd.f32 %v1925, %v2021
      %v2023 = vpop.f32.mrf.mxu0
      %v2024 = vpop.f32.mrf.mxu0
      %v2025 = vadd.f32 %v1928, %v2024
      %v2026 = vpop.f32.mrf.mxu0
      %2027 = vmatprep.mubr.bf16.mxu0 %v1318
      %2028 = vmatmul.mubr.bf16.gmra.mxu0 %v1317
      %v2029 = vpop.f32.mrf.mxu0
      %v2030 = vadd.f32 %v1933, %v2029
      %v2031 = vpop.f32.mrf.mxu0
      %v2032 = vpop.f32.mrf.mxu0
      %v2033 = vadd.f32 %v1936, %v2032
      %v2034 = vpop.f32.mrf.mxu0
      %2035 = vdwg.mxu0
      %2036 = vmatprep.subr.bf16.mxu0 0
      %2037 = vmatpush1.bf16.msra.mxu0 %v1753
      %2038 = vmatprep.subr.bf16.mxu0 0
      %2039 = vmatpush1.bf16.msra.mxu0 %v1752
      %2040 = vmatprep.subr.bf16.mxu0 0
      %2041 = vmatpush1.bf16.msra.mxu0 %v1751
      %2042 = vmatprep.subr.bf16.mxu0 0
      %2043 = vmatpush1.bf16.msra.mxu0 %v1750
      %2044 = vmatprep.subr.bf16.mxu0 0
      %2045 = vmatpush1.bf16.msra.mxu0 %v1749
      %2046 = vmatprep.subr.bf16.mxu0 0
      %2047 = vmatpush1.bf16.msra.mxu0 %v1748
      %2048 = vmatprep.subr.bf16.mxu0 0
      %2049 = vmatpush1.bf16.msra.mxu0 %v1747
      %2050 = vmatprep.subr.bf16.mxu0 0
      %2051 = vmatpush1.bf16.msra.mxu0 %v1746
      %2052 = vmatprep.subr.bf16.mxu0 0
      %2053 = vmatpush2.bf16.msra.mxu0 %v1761
      %2054 = vmatprep.subr.bf16.mxu0 0
      %2055 = vmatpush2.bf16.msra.mxu0 %v1760
      %2056 = vmatprep.subr.bf16.mxu0 0
      %2057 = vmatpush2.bf16.msra.mxu0 %v1759
      %2058 = vmatprep.subr.bf16.mxu0 0
      %2059 = vmatpush2.bf16.msra.mxu0 %v1758
      %2060 = vmatprep.subr.bf16.mxu0 0
      %2061 = vmatpush2.bf16.msra.mxu0 %v1757
      %2062 = vmatprep.subr.bf16.mxu0 0
      %2063 = vmatpush2.bf16.msra.mxu0 %v1756
      %2064 = vmatprep.subr.bf16.mxu0 0
      %2065 = vmatpush2.bf16.msra.mxu0 %v1755
      %2066 = vmatprep.subr.bf16.mxu0 0
      %2067 = vmatpush2.bf16.msra.mxu0 %v1754
      %2068 = vmatprep.mubr.bf16.mxu0 %v1264
      %2069 = vmatmul.mubr.bf16.gmra.mxu0 %v1263
      %v2070 = vpop.f32.mrf.mxu0
      %v2071 = vadd.f32 %v1974, %v2070
      %v2072 = vpop.f32.mrf.mxu0
      %v2073 = vpop.f32.mrf.mxu0
      %v2074 = vadd.f32 %v1977, %v2073
      %v2075 = vpop.f32.mrf.mxu0
      %2076 = vmatprep.mubr.bf16.mxu0 %v1272
      %2077 = vmatmul.mubr.bf16.gmra.mxu0 %v1271
      %v2078 = vpop.f32.mrf.mxu0
      %v2079 = vadd.f32 %v1982, %v2078
      %v2080 = vpop.f32.mrf.mxu0
      %v2081 = vpop.f32.mrf.mxu0
      %v2082 = vadd.f32 %v1985, %v2081
      %v2083 = vpop.f32.mrf.mxu0
      %2084 = vmatprep.mubr.bf16.mxu0 %v1280
      %2085 = vmatmul.mubr.bf16.gmra.mxu0 %v1279
      %v2086 = vpop.f32.mrf.mxu0
      %v2087 = vadd.f32 %v1990, %v2086
      %v2088 = vpop.f32.mrf.mxu0
      %v2089 = vpop.f32.mrf.mxu0
      %v2090 = vadd.f32 %v1993, %v2089
      %v2091 = vpop.f32.mrf.mxu0
      %2092 = vmatprep.mubr.bf16.mxu0 %v1288
      %2093 = vmatmul.mubr.bf16.gmra.mxu0 %v1287
      %v2094 = vpop.f32.mrf.mxu0
      %v2095 = vadd.f32 %v1998, %v2094
      %v2096 = vpop.f32.mrf.mxu0
      %v2097 = vpop.f32.mrf.mxu0
      %v2098 = vadd.f32 %v2001, %v2097
      %v2099 = vpop.f32.mrf.mxu0
      %2100 = vmatprep.mubr.bf16.mxu0 %v1296
      %2101 = vmatmul.mubr.bf16.gmra.mxu0 %v1295
      %v2102 = vpop.f32.mrf.mxu0
      %v2103 = vadd.f32 %v2006, %v2102
      %v2104 = vpop.f32.mrf.mxu0
      %v2105 = vpop.f32.mrf.mxu0
      %v2106 = vadd.f32 %v2009, %v2105
      %v2107 = vpop.f32.mrf.mxu0
      %2108 = vmatprep.mubr.bf16.mxu0 %v1304
      %2109 = vmatmul.mubr.bf16.gmra.mxu0 %v1303
      %v2110 = vpop.f32.mrf.mxu0
      %v2111 = vadd.f32 %v2014, %v2110
      %v2112 = vpop.f32.mrf.mxu0
      %v2113 = vpop.f32.mrf.mxu0
      %v2114 = vadd.f32 %v2017, %v2113
      %v2115 = vpop.f32.mrf.mxu0
      %2116 = vmatprep.mubr.bf16.mxu0 %v1312
      %2117 = vmatmul.mubr.bf16.gmra.mxu0 %v1311
      %v2118 = vpop.f32.mrf.mxu0
      %v2119 = vadd.f32 %v2022, %v2118
      %v2120 = vpop.f32.mrf.mxu0
      %v2121 = vpop.f32.mrf.mxu0
      %v2122 = vadd.f32 %v2025, %v2121
      %v2123 = vpop.f32.mrf.mxu0
      %2124 = vmatprep.mubr.bf16.mxu0 %v1320
      %2125 = vmatmul.mubr.bf16.gmra.mxu0 %v1319
      %v2126 = vpop.f32.mrf.mxu0
      %v2127 = vadd.f32 %v2030, %v2126
      %v2128 = vpop.f32.mrf.mxu0
      %v2129 = vpop.f32.mrf.mxu0
      %v2130 = vadd.f32 %v2033, %v2129
      %v2131 = vpop.f32.mrf.mxu0
      %2132 = vdwg.mxu0
      %2133 = vmatprep.subr.bf16.mxu0 0
      %2134 = vmatpush1.bf16.msra.mxu0 %v1769
      %2135 = vmatprep.subr.bf16.mxu0 0
      %2136 = vmatpush1.bf16.msra.mxu0 %v1768
      %2137 = vmatprep.subr.bf16.mxu0 0
      %2138 = vmatpush1.bf16.msra.mxu0 %v1767
      %2139 = vmatprep.subr.bf16.mxu0 0
      %2140 = vmatpush1.bf16.msra.mxu0 %v1766
      %2141 = vmatprep.subr.bf16.mxu0 0
      %2142 = vmatpush1.bf16.msra.mxu0 %v1765
      %2143 = vmatprep.subr.bf16.mxu0 0
      %2144 = vmatpush1.bf16.msra.mxu0 %v1764
      %2145 = vmatprep.subr.bf16.mxu0 0
      %2146 = vmatpush1.bf16.msra.mxu0 %v1763
      %2147 = vmatprep.subr.bf16.mxu0 0
      %2148 = vmatpush1.bf16.msra.mxu0 %v1762
      %2149 = vmatprep.subr.bf16.mxu0 0
      %2150 = vmatpush2.bf16.msra.mxu0 %v1777
      %2151 = vmatprep.subr.bf16.mxu0 0
      %2152 = vmatpush2.bf16.msra.mxu0 %v1776
      %2153 = vmatprep.subr.bf16.mxu0 0
      %2154 = vmatpush2.bf16.msra.mxu0 %v1775
      %2155 = vmatprep.subr.bf16.mxu0 0
      %2156 = vmatpush2.bf16.msra.mxu0 %v1774
      %2157 = vmatprep.subr.bf16.mxu0 0
      %2158 = vmatpush2.bf16.msra.mxu0 %v1773
      %2159 = vmatprep.subr.bf16.mxu0 0
      %2160 = vmatpush2.bf16.msra.mxu0 %v1772
      %2161 = vmatprep.subr.bf16.mxu0 0
      %2162 = vmatpush2.bf16.msra.mxu0 %v1771
      %2163 = vmatprep.subr.bf16.mxu0 0
      %2164 = vmatpush2.bf16.msra.mxu0 %v1770
      %2165 = vmatprep.mubr.bf16.mxu0 %v1266
      %2166 = vmatmul.mubr.bf16.gmra.mxu0 %v1265
      %v2167 = vpop.f32.mrf.mxu0
      %v2168 = vadd.f32 %v2071, %v2167
      %v2169 = vpop.f32.mrf.mxu0
      %v2170 = vpop.f32.mrf.mxu0
      %v2171 = vadd.f32 %v2074, %v2170
      %v2172 = vpop.f32.mrf.mxu0
      %2173 = vmatprep.mubr.bf16.mxu0 %v1274
      %2174 = vmatmul.mubr.bf16.gmra.mxu0 %v1273
      %v2175 = vpop.f32.mrf.mxu0
      %v2176 = vadd.f32 %v2079, %v2175
      %v2177 = vpop.f32.mrf.mxu0
      %v2178 = vpop.f32.mrf.mxu0
      %v2179 = vadd.f32 %v2082, %v2178
      %v2180 = vpop.f32.mrf.mxu0
      %2181 = vmatprep.mubr.bf16.mxu0 %v1282
      %2182 = vmatmul.mubr.bf16.gmra.mxu0 %v1281
      %v2183 = vpop.f32.mrf.mxu0
      %v2184 = vadd.f32 %v2087, %v2183
      %v2185 = vpop.f32.mrf.mxu0
      %v2186 = vpop.f32.mrf.mxu0
      %v2187 = vadd.f32 %v2090, %v2186
      %v2188 = vpop.f32.mrf.mxu0
      %2189 = vmatprep.mubr.bf16.mxu0 %v1290
      %2190 = vmatmul.mubr.bf16.gmra.mxu0 %v1289
      %v2191 = vpop.f32.mrf.mxu0
      %v2192 = vadd.f32 %v2095, %v2191
      %v2193 = vpop.f32.mrf.mxu0
      %v2194 = vpop.f32.mrf.mxu0
      %v2195 = vadd.f32 %v2098, %v2194
      %v2196 = vpop.f32.mrf.mxu0
      %2197 = vmatprep.mubr.bf16.mxu0 %v1298
      %2198 = vmatmul.mubr.bf16.gmra.mxu0 %v1297
      %v2199 = vpop.f32.mrf.mxu0
      %v2200 = vadd.f32 %v2103, %v2199
      %v2201 = vpop.f32.mrf.mxu0
      %v2202 = vpop.f32.mrf.mxu0
      %v2203 = vadd.f32 %v2106, %v2202
      %v2204 = vpop.f32.mrf.mxu0
      %2205 = vmatprep.mubr.bf16.mxu0 %v1306
      %2206 = vmatmul.mubr.bf16.gmra.mxu0 %v1305
      %v2207 = vpop.f32.mrf.mxu0
      %v2208 = vadd.f32 %v2111, %v2207
      %v2209 = vpop.f32.mrf.mxu0
      %v2210 = vpop.f32.mrf.mxu0
      %v2211 = vadd.f32 %v2114, %v2210
      %v2212 = vpop.f32.mrf.mxu0
      %2213 = vmatprep.mubr.bf16.mxu0 %v1314
      %2214 = vmatmul.mubr.bf16.gmra.mxu0 %v1313
      %v2215 = vpop.f32.mrf.mxu0
      %v2216 = vadd.f32 %v2119, %v2215
      %v2217 = vpop.f32.mrf.mxu0
      %v2218 = vpop.f32.mrf.mxu0
      %v2219 = vadd.f32 %v2122, %v2218
      %v2220 = vpop.f32.mrf.mxu0
      %2221 = vmatprep.mubr.bf16.mxu0 %v1322
      %2222 = vmatmul.mubr.bf16.gmra.mxu0 %v1321
      %v2223 = vpop.f32.mrf.mxu0
      %v2224 = vadd.f32 %v2127, %v2223
      %v2225 = vpop.f32.mrf.mxu0
      %v2226 = vpop.f32.mrf.mxu0
      %v2227 = vadd.f32 %v2130, %v2226
      %v2228 = vpop.f32.mrf.mxu0
      %2229 = vdwg.mxu0
      %v2230 = vmul.f32 %v2168, %v229
      %v2231 = vmul.f32 %v2171, %v230
      %v2232 = vmul.f32 %v2176, %v231
      %v2233 = vmul.f32 %v2179, %v232
      %v2234 = vmul.f32 %v2184, %v233
      %v2235 = vmul.f32 %v2187, %v234
      %v2236 = vmul.f32 %v2192, %v235
      %v2237 = vmul.f32 %v2195, %v236
      %v2238 = vmul.f32 %v2200, %v237
      %v2239 = vmul.f32 %v2203, %v238
      %v2240 = vmul.f32 %v2208, %v239
      %v2241 = vmul.f32 %v2211, %v240
      %v2242 = vmul.f32 %v2216, %v241
      %v2243 = vmul.f32 %v2219, %v242
      %v2244 = vmul.f32 %v2224, %v243
      %v2245 = vmul.f32 %v2227, %v244
      %2246 = vst [vmem:[%s226] sm:$0xff] %v2230
      %2247 = vst [vmem:[%s226 + $0x8] sm:$0xff] %v2231
      %2248 = vst [vmem:[%s226 + $0x10] sm:$0xff] %v2232
      %2249 = vst [vmem:[%s226 + $0x18] sm:$0xff] %v2233
      %2250 = vst [vmem:[%s226 + $0x20] sm:$0xff] %v2234
      %2251 = vst [vmem:[%s226 + $0x28] sm:$0xff] %v2235
      %2252 = vst [vmem:[%s226 + $0x30] sm:$0xff] %v2236
      %2253 = vst [vmem:[%s226 + $0x38] sm:$0xff] %v2237
      %2254 = vst [vmem:[%s226 + $0x40] sm:$0xff] %v2238
      %2255 = vst [vmem:[%s226 + $0x48] sm:$0xff] %v2239
      %2256 = vst [vmem:[%s226 + $0x50] sm:$0xff] %v2240
      %2257 = vst [vmem:[%s226 + $0x58] sm:$0xff] %v2241
      %2258 = vst [vmem:[%s226 + $0x60] sm:$0xff] %v2242
      %2259 = vst [vmem:[%s226 + $0x68] sm:$0xff] %v2243
      %2260 = vst [vmem:[%s226 + $0x70] sm:$0xff] %v2244
      %2261 = vst [vmem:[%s226 + $0x78] sm:$0xff] %v2245
      %s2262 = smul.u32 16, %s16
      %p2263 = scmp.lt.s32.totalorder %s2262, 31
      %s2264 = scalar_select %p2263, %s2262, 31
      %s2265 = smul.addr %s2264, 8
      %s2266 = scalar_lea.vmem %s5, %s2265
      // Predicated region
      $region41: #{dqn_forward.1} parent=39 // pred_check
        %p2267 = pneg %p144
      $region42: #{dqn_forward.1} parent=39 // pred_check_branch
        %2269 = sbr.rel (%p2267) target = $region44
      $region43: #{dqn_forward.1} parent=39 // pred_region
        %s2270 = smul.u32 16, %s16
      $region44: #{dqn_forward.1} parent=39 // pred_fallthru
        _
    $region40: #{dqn_forward.1} parent=5 // pred_fallthru
      _
    %p2271 = scmp.le.s32.totalorder 2, %s11
    // Predicated region
    $region45: #{dqn_forward.1} parent=5 // pred_check
      %p2272 = pneg %p2271
    $region46: #{dqn_forward.1} parent=5 // pred_check_branch
      %2274 = sbr.rel (%p2272) target = $region48
    $region47: #{dqn_forward.1} parent=5 // pred_region
      %s2275 = ssub.s32 %s11, 2
      // Predicated region
      $region49: #{dqn_forward.1} parent=47 // pred_check
        %p2276 = pneg %p150
      $region50: #{dqn_forward.1} parent=47 // pred_check_branch
        %2278 = sbr.rel (%p2276) target = $region52
      $region51: #{dqn_forward.1} parent=47 // pred_region
        %s2279 = smul.u32 16, %s17
        %p2280 = scmp.lt.s32.totalorder %s2279, 31
        %s2281 = scalar_select %p2280, %s2279, 31
        %s2282 = smul.addr %s2281, 8
        %s2283 = scalar_lea.vmem %s5, %s2282
      $region52: #{dqn_forward.1} parent=47 // pred_fallthru
        _
    $region48: #{dqn_forward.1} parent=5 // pred_fallthru
      _
  $region6: #{dqn_forward.1} parent=0 // loop_footer
    %s15 = sadd.s32 1, %s11
  $region7: #{dqn_forward.1} parent=0 // loop_footer_branch
    %10 = sbr.rel target = $region3
  $region8: #{dqn_forward.1} parent=0 // loop_exit
    _

</llo_original>
